<compile_context>
chip_gen: v5e
topology: v5e:2x2
jax: 0.10.0
libtpu: 0.0.40
codegen_flags: <defaults>
</compile_context>

<pallas_src>
import functools
import math

import jax
import jax.numpy as jnp
from jax.experimental import pallas as pl
from jax.experimental.pallas import tpu as pltpu


# ----------------------------------------------------------------------------
# Kernel 1: masked average pooling + bias-free classifier (+ optional fused BCE)
# ----------------------------------------------------------------------------
def _head_kernel(*refs, with_loss):
    if with_loss:
        (hid_ref, mask_ref, w_ref, tgt_ref,
         logits_ref, part_ref, acc_ref, cnt_ref) = refs
    else:
        hid_ref, mask_ref, w_ref, logits_ref, acc_ref, cnt_ref = refs

    s = pl.program_id(1)

    @pl.when(s == 0)
    def _init():
        acc_ref[...] = jnp.zeros_like(acc_ref)
        cnt_ref[...] = jnp.zeros_like(cnt_ref)

    # One (TB, TS, H) slab of encoder output per step; mask is lane-dense (TB, TS).
    h = hid_ref[...].astype(jnp.float32)
    m = mask_ref[...].astype(jnp.float32)
    acc_ref[...] += jnp.sum(h * m[:, :, None], axis=1)        # masked sum over sequence
    cnt_ref[...] += jnp.sum(m, axis=1, keepdims=True)         # valid-token count

    @pl.when(s == pl.num_programs(1) - 1)
    def _finalize():
        # nn.Dropout is the identity at inference time.
        w = w_ref[...].astype(jnp.float32)
        raw = jnp.dot(acc_ref[...], w, preferred_element_type=jnp.float32)   # (TB, A)
        # The per-row scale commutes with the linear layer, so divide the (TB, A)
        # logits instead of the (TB, H) pooled activations.  Exact divide (tiny).
        logits = raw / cnt_ref[...]
        logits_ref[...] = logits.astype(logits_ref.dtype)
        if with_loss:
            y = tgt_ref[...].astype(jnp.float32)
            # Numerically-stable BCEWithLogits term: max(x,0) - x*y + log(1 + e^{-|x|}).
            e = jnp.exp(-jnp.abs(logits))
            elem = jnp.maximum(logits, 0.0) - logits * y + jnp.log(1.0 + e)
            part_ref[0] = jnp.sum(elem, axis=0, keepdims=True)   # lane-dense (1, A)


def _pick_seq_tile(seq_len, tb, hidden_dim, itemsize, budget_bytes):
    """Largest 128-multiple divisor of seq_len whose (tb, ts, H) slab fits the budget."""
    divisors = [t for t in range(128, seq_len + 1, 128) if seq_len % t == 0]
    fitting = [t for t in divisors if tb * t * hidden_dim * itemsize <= budget_bytes]
    if fitting:
        return max(fitting)
    if divisors:
        return min(divisors)
    return seq_len


def transformer_head_forward(hidden, attention_mask, w_classifier, targets=None, *,
                             avg_pooling=True, seq_tile_budget_bytes=4 * 1024 * 1024):
    """Everything in TransformerModel.forward after the encoder: returns (loss, logits).

    hidden: (B, S, H) encoder last_hidden_state (f32 or bf16; kept in its own dtype).
    attention_mask: (B, S).  w_classifier: (H, A).  targets: optional (B, A).
    Note: an all-zero attention-mask row divides by zero, exactly like the PyTorch code.
    """
    B, S, H = hidden.shape
    A = w_classifier.shape[1]

    if not avg_pooling:
        # CLS pooling reads only token 0: slice before the kernel so only that row is
        # fetched from HBM; averaging a length-1 sequence with an all-ones mask then
        # reproduces outputs[0][:, 0, :] exactly.
        hidden = hidden[:, :1, :]
        attention_mask = jnp.ones((B, 1), dtype=jnp.float32)
        S = 1

    itemsize = jnp.dtype(hidden.dtype).itemsize
    tb = 8 if B % 8 == 0 else B          # sublane-friendly batch tile (or whole batch)
    ts = _pick_seq_tile(S, tb, H, itemsize, seq_tile_budget_bytes)
    nb, ns = B // tb, S // ts

    with_loss = targets is not None
    kernel = functools.partial(_head_kernel, with_loss=with_loss)

    in_specs = [
        pl.BlockSpec((tb, ts, H), lambda b, s: (b, s, 0)),   # hidden slab (streamed)
        pl.BlockSpec((tb, ts), lambda b, s: (b, s)),         # lane-dense mask tile
        pl.BlockSpec((H, A), lambda b, s: (0, 0)),           # classifier weight (resident)
    ]
    operands = [hidden, attention_mask, w_classifier]
    if with_loss:
        in_specs.append(pl.BlockSpec((tb, A), lambda b, s: (b, 0)))
        operands.append(targets)
        out_shape = (jax.ShapeDtypeStruct((B, A), jnp.float32),
                     jax.ShapeDtypeStruct((nb, 1, A), jnp.float32))
        out_specs = [pl.BlockSpec((tb, A), lambda b, s: (b, 0)),
                     pl.BlockSpec((1, 1, A), lambda b, s: (b, 0, 0))]
    else:
        out_shape = jax.ShapeDtypeStruct((B, A), jnp.float32)
        out_specs = pl.BlockSpec((tb, A), lambda b, s: (b, 0))

    tile_bytes = tb * ts * H * itemsize
    vmem_limit = int(min(max(2 * tile_bytes + 2 * tb * max(ts, 128) * 4 + H * A * 4
                             + 8 * tb * A * 4 + tb * (H + 128) * 4 + (4 << 20),
                             16 << 20),
                         48 << 20))

    result = pl.pallas_call(
        kernel,
        out_shape=out_shape,
        grid_spec=pltpu.PrefetchScalarGridSpec(
            num_scalar_prefetch=0,
            grid=(nb, ns),
            in_specs=in_specs,
            out_specs=out_specs,
            scratch_shapes=[pltpu.VMEM((tb, H), jnp.float32),    # masked-sum accumulator
                            pltpu.VMEM((tb, 1), jnp.float32)],   # token-count accumulator
        ),
        compiler_params=pltpu.CompilerParams(
            dimension_semantics=("parallel", "arbitrary"),
            vmem_limit_bytes=vmem_limit,
        ),
        cost_estimate=pl.CostEstimate(
            flops=2 * B * S * H + 2 * B * H * A + (4 * B * A if with_loss else 0),
            transcendentals=(2 * B * A) if with_loss else 0,
            bytes_accessed=(B * S * H + H * A) * itemsize + B * S * 4
                           + B * A * 4 * (3 if with_loss else 1),
        ),
    )(*operands)

    if not with_loss:
        return None, result
    logits, partials = result
    loss = jnp.sum(partials) / jnp.float32(B * A)
    return loss, logits


# ----------------------------------------------------------------------------
# Kernel 2 (standalone): sigmoid(logits) + BCE-with-logits partial sums
# ----------------------------------------------------------------------------
def _bce_sigmoid_kernel(logits_ref, targets_ref, sig_ref, partial_ref):
    x = logits_ref[...].astype(jnp.float32)
    y = targets_ref[...].astype(jnp.float32)

    # One shared transcendental e = exp(-|x|) in (0, 1] feeds both sigmoid and loss.
    e = jnp.exp(-jnp.abs(x))
    inv = 1.0 / (1.0 + e)               # exact divide: these are returned probabilities
    sig_ref[...] = jnp.where(x >= 0.0, inv, 1.0 - inv).astype(sig_ref.dtype)

    elem = jnp.maximum(x, 0.0) - x * y + jnp.log(1.0 + e)
    # Lane-dense per-block partial row-sum; final reduce + mean happens in the wrapper
    # so grid blocks stay independent ("parallel" -> both TCs on v7x).
    partial_ref[0] = jnp.sum(elem, axis=0, keepdims=True)


def bce_with_logits_and_sigmoid(logits, targets, *, max_block_bytes=4 * 1024 * 1024):
    """Returns (sigmoid(logits), mean BCEWithLogitsLoss(logits, targets)).

    targets may be f32 / bf16 / int 0-1 (cast in-register, so low-precision targets
    halve their HBM traffic).  Sigmoid output matches the logits dtype.
    On v5e/v6e (128 MiB VMEM), max_block_bytes of 8-16 MiB amortizes grid overhead
    further; 4 MiB is a safe default that also fits v7x's 64 MiB VMEM.
    """
    M, N = logits.shape
    sig_dtype = logits.dtype

    # Large row tile (multiple of 8) under the per-buffer budget; pad M up to a multiple
    # of it.  Padded elements have x=0, y=0 and each contributes exactly log(2).
    target_rows = max(8, (max_block_bytes // (N * 4)) // 8 * 8)
    m8 = (M + 7) // 8 * 8
    block_rows = min(target_rows, m8)
    if m8 > 8 and block_rows >= m8:
        # Guarantee >= 2 grid blocks so the "parallel" axis can shard across both TCs.
        block_rows = max(8, ((m8 // 2 + 7) // 8) * 8)
    m_pad = ((M + block_rows - 1) // block_rows) * block_rows
    num_blocks = m_pad // block_rows
    pad_rows = m_pad - M
    if pad_rows:
        logits = jnp.pad(logits, ((0, pad_rows), (0, 0)))
        targets = jnp.pad(targets, ((0, pad_rows), (0, 0)))

    block_bytes = block_rows * N * 4
    vmem_limit = int(min(max(8 * block_bytes + (2 << 20), 16 << 20), 48 << 20))

    sig_full, partials = pl.pallas_call(
        _bce_sigmoid_kernel,
        out_shape=(
            jax.ShapeDtypeStruct((m_pad, N), sig_dtype),           # sigmoid(logits)
            jax.ShapeDtypeStruct((num_blocks, 1, N), jnp.float32),  # per-block partials
        ),
        grid_spec=pltpu.PrefetchScalarGridSpec(
            num_scalar_prefetch=0,
            grid=(num_blocks,),
            in_specs=[pl.BlockSpec((block_rows, N), lambda i: (i, 0)),
                      pl.BlockSpec((block_rows, N), lambda i: (i, 0))],
            out_specs=[pl.BlockSpec((block_rows, N), lambda i: (i, 0)),
                       pl.BlockSpec((1, 1, N), lambda i: (i, 0, 0))],
        ),
        compiler_params=pltpu.CompilerParams(
            dimension_semantics=("parallel",),
            vmem_limit_bytes=vmem_limit,
        ),
        cost_estimate=pl.CostEstimate(
            flops=8 * m_pad * N,
            transcendentals=m_pad * N,
            bytes_accessed=3 * m_pad * N * 4,
        ),
    )(logits, targets)

    total = jnp.sum(partials)
    if pad_rows:
        total = total - jnp.float32(pad_rows * N * math.log(2.0))
    loss = total / jnp.float32(M * N)
    return sig_full[:M], loss


if __name__ == "__main__":
    key = jax.random.PRNGKey(0)
    k1, k2, k3, k4, k5, k6 = jax.random.split(key, 6)

    # --- TransformerModel head (post-encoder) at small shapes ---
    B, S, H, A = 16, 256, 128, 128     # batch, seq_len, hidden_size, answer_num
    # TODO(synk): the pretrained HuggingFace transformer encoder itself is not
    # translated; `hidden` stands in for encoder(...)[0] (last_hidden_state).
    hidden = jax.random.normal(k1, (B, S, H), dtype=jnp.float32)
    lengths = jax.random.randint(k2, (B,), 1, S + 1)
    attention_mask = (jnp.arange(S)[None, :] < lengths[:, None]).astype(jnp.float32)
    w_cls = 0.05 * jax.random.normal(k3, (H, A), dtype=jnp.float32)
    targets = (jax.random.uniform(k4, (B, A)) > 0.5).astype(jnp.float32)

    # Small seq-tile budget so the toy shape still exercises the pipelined S loop.
    loss, logits = transformer_head_forward(hidden, attention_mask, w_cls, targets,
                                            seq_tile_budget_bytes=512 * 1024)
    jax.block_until_ready((loss, logits))

    # Pure-JAX references.
    pooled_ref = (hidden * attention_mask[:, :, None]).sum(1) / attention_mask.sum(
        1, keepdims=True)
    logits_ref = pooled_ref @ w_cls

    def ref_bce(x, y):
        return jnp.mean(jnp.maximum(x, 0.0) - x * y + jnp.log1p(jnp.exp(-jnp.abs(x))))

    # Matmul compared loosely (MXU default precision vs the XLA reference); the loss is
    # validated against the kernel's own logits so errors don't compound.
    assert jnp.allclose(logits, logits_ref, atol=5e-3, rtol=5e-3), "logits mismatch"
    assert jnp.allclose(loss, ref_bce(logits, targets), atol=1e-5, rtol=1e-4), \
        "loss mismatch"

    # Inference path (targets=None) and CLS pooling (avg_pooling=False).
    loss_none, logits_cls = transformer_head_forward(hidden, attention_mask, w_cls,
                                                     avg_pooling=False)
    jax.block_until_ready(logits_cls)
    assert loss_none is None
    assert jnp.allclose(logits_cls, hidden[:, 0, :] @ w_cls, atol=5e-3, rtol=5e-3), \
        "CLS logits mismatch"

    # --- Standalone BCE+sigmoid kernel: multi-block grid + ragged-row padding path ---
    M2, N2 = 300, 256                          # 300 rows -> padded up to a tile multiple
    logits2 = jax.random.normal(k5, (M2, N2), dtype=jnp.float32)
    targets2 = (jax.random.uniform(k6, (M2, N2)) > 0.5).astype(jnp.bfloat16)
    sig2, loss2 = bce_with_logits_and_sigmoid(logits2, targets2,
                                              max_block_bytes=64 * 1024)  # forces a grid
    jax.block_until_ready((sig2, loss2))
    assert sig2.shape == (M2, N2)
    assert jnp.allclose(sig2, jax.nn.sigmoid(logits2), atol=1e-4), "sigmoid mismatch"
    assert jnp.allclose(loss2, ref_bce(logits2, targets2.astype(jnp.float32)),
                        atol=1e-5, rtol=1e-4), "BCE loss mismatch"

    print("KERNEL_OK")
</pallas_src>

<mosaic_0001>
module attributes {stable_mosaic.version = 11 : i64} {
  func.func @_head_kernel(%arg0: i32, %arg1: i32, %arg2: memref<8x128x128xf32, #tpu.memory_space<vmem>>, %arg3: memref<8x128xf32, #tpu.memory_space<vmem>>, %arg4: memref<128x128xf32, #tpu.memory_space<vmem>>, %arg5: memref<8x128xf32, #tpu.memory_space<vmem>>, %arg6: memref<8x128xf32, #tpu.memory_space<vmem>>, %arg7: memref<1x1x128xf32, #tpu.memory_space<vmem>>, %arg8: memref<8x128xf32, #tpu.memory_space<vmem>>, %arg9: memref<8x1xf32, #tpu.memory_space<vmem>>) attributes {dimension_semantics = [#tpu.dimension_semantics<parallel>, #tpu.dimension_semantics<arbitrary>], iteration_bounds = array<i64: 2, 2>, scalar_prefetch = 0 : i64, scratch_operands = 2 : i64, tpu.core_type = #tpu.core_type<tc>, window_params = [{transform_indices = @transform_0, window_bounds = array<i64: 8, 128, 128>}, {transform_indices = @transform_1, window_bounds = array<i64: 8, 128>}, {pipeline_mode = #tpu.pipeline_mode<synchronous>, transform_indices = @transform_2, window_bounds = array<i64: 128, 128>}, {transform_indices = @transform_3, window_bounds = array<i64: 8, 128>}, {transform_indices = @transform_4, window_bounds = array<i64: 8, 128>}, {transform_indices = @transform_5, window_bounds = array<i64: 1, 1, 128>}]} {
    %c0_i32 = arith.constant 0 : i32
    %0 = arith.cmpi eq, %arg1, %c0_i32 : i32
    %1 = arith.extui %0 : i1 to i32
    %c0_i32_0 = arith.constant 0 : i32
    %2 = arith.cmpi ne, %1, %c0_i32_0 : i32
    scf.if %2 {
      %cst_15 = arith.constant 0.000000e+00 : f32
      %20 = vector.broadcast %cst_15 : f32 to vector<8x128xf32>
      %c0_16 = arith.constant 0 : index
      %c0_17 = arith.constant 0 : index
      %21 = vector.load %arg8[%c0_16, %c0_17] : memref<8x128xf32, #tpu.memory_space<vmem>>, vector<8x128xf32>
      tpu.vector_store %arg8[%c0_16, %c0_17], %20 {strides = array<i32>} : memref<8x128xf32, #tpu.memory_space<vmem>>, vector<8x128xf32>,
      %cst_18 = arith.constant 0.000000e+00 : f32
      %22 = vector.broadcast %cst_18 : f32 to vector<8x1xf32>
      %c0_19 = arith.constant 0 : index
      %c0_20 = arith.constant 0 : index
      %23 = vector.load %arg9[%c0_19, %c0_20] : memref<8x1xf32, #tpu.memory_space<vmem>>, vector<8x1xf32>
      tpu.vector_store %arg9[%c0_19, %c0_20], %22 {strides = array<i32>} : memref<8x1xf32, #tpu.memory_space<vmem>>, vector<8x1xf32>,
    } else {
    }
    %c0 = arith.constant 0 : index
    %c0_1 = arith.constant 0 : index
    %c0_2 = arith.constant 0 : index
    %3 = vector.load %arg2[%c0, %c0_1, %c0_2] : memref<8x128x128xf32, #tpu.memory_space<vmem>>, vector<8x128x128xf32>
    %c0_3 = arith.constant 0 : index
    %c0_4 = arith.constant 0 : index
    %4 = vector.load %arg3[%c0_3, %c0_4] : memref<8x128xf32, #tpu.memory_space<vmem>>, vector<8x128xf32>
    %c0_5 = arith.constant 0 : index
    %c0_6 = arith.constant 0 : index
    %5 = vector.load %arg8[%c0_5, %c0_6] : memref<8x128xf32, #tpu.memory_space<vmem>>, vector<8x128xf32>
    %6 = vector.shape_cast %4 : vector<8x128xf32> to vector<8x128x1xf32>
    %7 = vector.broadcast %6 : vector<8x128x1xf32> to vector<8x128x128xf32>
    %8 = arith.mulf %3, %7 : vector<8x128x128xf32>
    %cst = arith.constant dense<0.000000e+00> : vector<8x128xf32>
    %9 = vector.multi_reduction <add>, %8, %cst [1] : vector<8x128x128xf32> to vector<8x128xf32>
    %10 = arith.addf %5, %9 : vector<8x128xf32>
    %c0_7 = arith.constant 0 : index
    %c0_8 = arith.constant 0 : index
    %11 = vector.load %arg8[%c0_7, %c0_8] : memref<8x128xf32, #tpu.memory_space<vmem>>, vector<8x128xf32>
    tpu.vector_store %arg8[%c0_7, %c0_8], %10 {strides = array<i32>} : memref<8x128xf32, #tpu.memory_space<vmem>>, vector<8x128xf32>,
    %c0_9 = arith.constant 0 : index
    %c0_10 = arith.constant 0 : index
    %12 = vector.load %arg9[%c0_9, %c0_10] : memref<8x1xf32, #tpu.memory_space<vmem>>, vector<8x1xf32>
    %cst_11 = arith.constant dense<0.000000e+00> : vector<8xf32>
    %13 = vector.multi_reduction <add>, %4, %cst_11 [1] : vector<8x128xf32> to vector<8xf32>
    %14 = vector.shape_cast %13 : vector<8xf32> to vector<8x1xf32>
    %15 = arith.addf %12, %14 : vector<8x1xf32>
    %c0_12 = arith.constant 0 : index
    %c0_13 = arith.constant 0 : index
    %16 = vector.load %arg9[%c0_12, %c0_13] : memref<8x1xf32, #tpu.memory_space<vmem>>, vector<8x1xf32>
    tpu.vector_store %arg9[%c0_12, %c0_13], %15 {strides = array<i32>} : memref<8x1xf32, #tpu.memory_space<vmem>>, vector<8x1xf32>,
    %c1_i32 = arith.constant 1 : i32
    %17 = arith.cmpi eq, %arg1, %c1_i32 : i32
    %18 = arith.extui %17 : i1 to i32
    %c0_i32_14 = arith.constant 0 : i32
    %19 = arith.cmpi ne, %18, %c0_i32_14 : i32
    scf.if %19 {
      %c0_15 = arith.constant 0 : index
      %c0_16 = arith.constant 0 : index
      %20 = vector.load %arg4[%c0_15, %c0_16] : memref<128x128xf32, #tpu.memory_space<vmem>>, vector<128x128xf32>
      %c0_17 = arith.constant 0 : index
      %c0_18 = arith.constant 0 : index
      %21 = vector.load %arg8[%c0_17, %c0_18] : memref<8x128xf32, #tpu.memory_space<vmem>>, vector<8x128xf32>
      %cst_19 = arith.constant dense<0.000000e+00> : vector<8x128xf32>
      %22 = tpu.matmul %21, %20, %cst_19 {dimension_numbers = #tpu.dot_dimension_numbers<[1], [0], [0], [1], [0, 0, 1, 1], [], []>} : vector<8x128xf32>, vector<128x128xf32>, vector<8x128xf32> -> vector<8x128xf32>
      %c0_20 = arith.constant 0 : index
      %c0_21 = arith.constant 0 : index
      %23 = vector.load %arg9[%c0_20, %c0_21] : memref<8x1xf32, #tpu.memory_space<vmem>>, vector<8x1xf32>
      %24 = vector.broadcast %23 : vector<8x1xf32> to vector<8x128xf32>
      %25 = arith.divf %22, %24 : vector<8x128xf32>
      %c0_22 = arith.constant 0 : index
      %c0_23 = arith.constant 0 : index
      %26 = vector.load %arg6[%c0_22, %c0_23] : memref<8x128xf32, #tpu.memory_space<vmem>>, vector<8x128xf32>
      tpu.vector_store %arg6[%c0_22, %c0_23], %25 {strides = array<i32>} : memref<8x128xf32, #tpu.memory_space<vmem>>, vector<8x128xf32>,
      %c0_24 = arith.constant 0 : index
      %c0_25 = arith.constant 0 : index
      %27 = vector.load %arg5[%c0_24, %c0_25] : memref<8x128xf32, #tpu.memory_space<vmem>>, vector<8x128xf32>
      %28 = math.absf %25 : vector<8x128xf32>
      %cst_26 = arith.constant 0.000000e+00 : f32
      %29 = vector.broadcast %cst_26 : f32 to vector<8x128xf32>
      %30 = arith.subf %29, %28 : vector<8x128xf32>
      %31 = math.exp %30 : vector<8x128xf32>
      %cst_27 = arith.constant 0.000000e+00 : f32
      %32 = vector.broadcast %cst_27 : f32 to vector<8x128xf32>
      %33 = arith.maximumf %25, %32 : vector<8x128xf32>
      %34 = arith.mulf %25, %27 : vector<8x128xf32>
      %35 = arith.subf %33, %34 : vector<8x128xf32>
      %cst_28 = arith.constant 1.000000e+00 : f32
      %36 = vector.broadcast %cst_28 : f32 to vector<8x128xf32>
      %37 = arith.addf %36, %31 : vector<8x128xf32>
      %38 = math.log %37 : vector<8x128xf32>
      %39 = arith.addf %35, %38 : vector<8x128xf32>
      %cst_29 = arith.constant dense<0.000000e+00> : vector<128xf32>
      %40 = vector.multi_reduction <add>, %39, %cst_29 [0] : vector<8x128xf32> to vector<128xf32>
      %41 = vector.shape_cast %40 : vector<128xf32> to vector<1x128xf32>
      %c0_30 = arith.constant 0 : index
      %c0_31 = arith.constant 0 : index
      %c0_32 = arith.constant 0 : index
      %42 = vector.load %arg7[%c0_30, %c0_31, %c0_32] : memref<1x1x128xf32, #tpu.memory_space<vmem>>, vector<1x1x128xf32>
      %43 = vector.shape_cast %42 : vector<1x1x128xf32> to vector<1x128xf32>
      %44 = vector.shape_cast %41 : vector<1x128xf32> to vector<1x1x128xf32>
      tpu.vector_store %arg7[%c0_30, %c0_31, %c0_32], %44 {strides = array<i32>} : memref<1x1x128xf32, #tpu.memory_space<vmem>>, vector<1x1x128xf32>,
    } else {
    }
    return
  }
  func.func @transform_0(%arg0: i32, %arg1: i32) -> (i32, i32, i32) {
    %c0_i32 = arith.constant 0 : i32
    %c0_i32_0 = arith.constant 0 : i32
    return %arg0, %arg1, %c0_i32 : i32, i32, i32
  }
  func.func @transform_1(%arg0: i32, %arg1: i32) -> (i32, i32) {
    %c0_i32 = arith.constant 0 : i32
    return %arg0, %arg1 : i32, i32
  }
  func.func @transform_2(%arg0: i32, %arg1: i32) -> (i32, i32) {
    %c0_i32 = arith.constant 0 : i32
    %c0_i32_0 = arith.constant 0 : i32
    %c0_i32_1 = arith.constant 0 : i32
    return %c0_i32, %c0_i32_0 : i32, i32
  }
  func.func @transform_3(%arg0: i32, %arg1: i32) -> (i32, i32) {
    %c0_i32 = arith.constant 0 : i32
    %c0_i32_0 = arith.constant 0 : i32
    return %arg0, %c0_i32 : i32, i32
  }
  func.func @transform_4(%arg0: i32, %arg1: i32) -> (i32, i32) {
    %c0_i32 = arith.constant 0 : i32
    %c0_i32_0 = arith.constant 0 : i32
    return %arg0, %c0_i32 : i32, i32
  }
  func.func @transform_5(%arg0: i32, %arg1: i32) -> (i32, i32, i32) {
    %c0_i32 = arith.constant 0 : i32
    %c0_i32_0 = arith.constant 0 : i32
    %c0_i32_1 = arith.constant 0 : i32
    return %arg0, %c0_i32, %c0_i32_0 : i32, i32, i32
  }
}

</mosaic_0001>

<llo_original>
// kernel: tpu_custom_call.1
$region0: #{tpu_custom_call.1}
  #allocation0 [shape = 'u32[]', space=smem, size = 0x4, offset = 0x4, fixed_abs, tag = 'smem constant byte address 0x4 - core index']
  #allocation1 [shape = 'u32[72,128]{1,0:T(1,128)}', space=vmem, size = 0x9000, scoped, tag = 'internal scratch']
  #allocation2 [shape = 'f32[8,128]{1,0:T(8,128)}', space=vmem, size = 0x1000, scoped, tag = 'scratch operand']
  #allocation3 [shape = 'f32[8,1]{1,0:T(8,128)}', space=vmem, size = 0x1000, scoped, tag = 'scratch operand']
  #allocation15 [shape = 's32[]', space=sflag, size = 0x4, offset = 0, fixed_abs, tag = 'sflag constant byte address 0x0 - dummy sync flag']
  %s0 = inlined_call_operand.hbm [shape: f32[16,256,128], index: 0, kind: input, shape index: {}]
  %s1 = inlined_call_operand.hbm [shape: f32[16,256], index: 1, kind: input, shape index: {}]
  %s2 = inlined_call_operand.hbm [shape: f32[128,128], index: 2, kind: input, shape index: {}]
  %s3 = inlined_call_operand.hbm [shape: f32[16,128], index: 3, kind: input, shape index: {}]
  %s4 = inlined_call_operand.hbm [shape: f32[16,128], index: 4, kind: output, shape index: {0}]
  %s5 = inlined_call_operand.hbm [shape: f32[2,1,128], index: 5, kind: output, shape index: {1}]
  %6 = xla_tuple %s4, %s5
  %s7 = sld [smem:[#allocation0]]
  $region81: #{tpu_custom_call.1} parent=0
    _
  %s9 = ssub.s32 1, %s7
  %s10 = scalar_select 0, %s9, %s7
  $region1: #{tpu_custom_call.1} parent=0
    #allocation4 [shape = 'u8[1048576]{0}', space=vmem, size = 0x100000, scoped, tag = 'input window, operand 0']
    #allocation5 [shape = 's32[2]{0}', space=sflag, size = 0x8, scoped, tag = 'scoped memory for tpu_custom_call.1']
    #allocation6 [shape = 's32[2]{0}', space=sflag, size = 0x8, scoped, tag = 'scoped memory for tpu_custom_call.1']
    #allocation7 [shape = 'u8[8192]{0}', space=vmem, size = 0x2000, scoped, tag = 'input window, operand 1']
    #allocation8 [shape = 's32[2]{0}', space=sflag, size = 0x8, scoped, tag = 'scoped memory for tpu_custom_call.1']
    #allocation9 [shape = 'u8[65536]{0}', space=vmem, size = 0x10000, scoped, tag = 'input window, operand 2, single buffered']
    #allocation10 [shape = 'u8[8192]{0}', space=vmem, size = 0x2000, scoped, tag = 'input window, operand 3']
    #allocation11 [shape = 's32[2]{0}', space=sflag, size = 0x8, scoped, tag = 'scoped memory for tpu_custom_call.1']
    #allocation12 [shape = 'u8[8192]{0}', space=vmem, size = 0x2000, scoped, tag = 'output window, operand 0']
    #allocation13 [shape = 'u8[1024]{0}', space=vmem, size = 0x400, scoped, tag = 'output window, operand 1']
    #allocation14 [shape = 's32[2]{0}', space=sflag, size = 0x8, scoped, tag = 'scoped memory for tpu_custom_call.1']
    %11 = vsyncpa [#allocation5], 0
    %s12 = scalar_lea.sflag [#allocation5], 1
    %13 = vsyncpa %s12, 0
    %14 = vsyncpa [#allocation8], 0
    %s15 = scalar_lea.sflag [#allocation8], 1
    %16 = vsyncpa %s15, 0
    %17 = vsyncpa [#allocation11], 0
    %s18 = scalar_lea.sflag [#allocation11], 1
    %19 = vsyncpa %s18, 0
    %20 = vsyncpa [#allocation6], 0
    %s21 = scalar_lea.sflag [#allocation6], 1
    %22 = vsyncpa %s21, 0
    %23 = vsyncpa [#allocation14], 0
    %s24 = scalar_lea.sflag [#allocation14], 1
    %25 = vsyncpa %s24, 0
    loop: start=0, step=1, limit=6
    $region2: #{tpu_custom_call.1} parent=1 // loop_pre_header
      _
    $region3: #{tpu_custom_call.1} parent=1 // loop_header
      %s27 = sphi 0, %s31
      %p28 = scmp.ge.s32.totalorder %s27, 6
      %s34 = sphi 0, %s46
      %s35 = sphi 0, %s42
      %s36 = sphi 0, %s34
      %s37 = sphi 0, %s35
      %s38 = sphi 0, %s36
      %s39 = sphi 0, %s37
      %s51 = sphi 0, %s53
      %s54 = sphi 0, %s51
      %s55 = sphi 0, %s54
      %s71 = sphi 0, %s55
      %s79 = sphi 0, %s81
      %s82 = sphi 0, %s79
      %s83 = sphi 0, %s82
      %s99 = sphi 0, %s83
      %s103 = sphi 0, %s103
      %s105 = sphi 0, %s103
      %s106 = sphi 0, %s105
      %s120 = sphi 0, %s106
      %s126 = sphi 0, %s128
      %s129 = sphi 0, %s126
      %s130 = sphi 0, %s129
      %s146 = sphi 0, %s130
      %s152 = sphi 0, %s154
      %s155 = sphi 0, %s152
      %s156 = sphi 0, %s155
      %s172 = sphi 0, %s156
      %s178 = sphi 0, %s180
      %s181 = sphi 0, %s178
      %s182 = sphi 0, %s181
      %s198 = sphi 0, %s182
    $region4: #{tpu_custom_call.1} parent=1 // loop_header_branch
      %30 = sbr.rel (%p28) target = $region8
    $region5: #{tpu_custom_call.1} parent=1 // loop_body
      %s32 = ssub.s32 %s27, 1
      %s33 = ssub.s32 %s27, 2
      %s40 = sadd.s32 1, %s35
      %p41 = scmp.ge.s32.totalorder %s40, 2
      %s42 = scalar_select %p41, 0, %s40
      %s43 = sadd.s32 1, %s34
      %s44 = scalar_select %p41, %s43, %s34
      %p45 = scmp.ge.s32.totalorder %s44, 2
      %s46 = scalar_select %p45, 0, %s44
      %s47 = ssub.s32 %s34, %s46
      %s48 = ssub.s32 %s35, %s42
      %s49 = sor.u32 %s47, %s48
      %p50 = scmp.eq.s32.totalorder %s49, 0
      %s52 = sadd.s32 %s51, 1
      %s53 = scalar_select %p50, %s51, %s52
      %p56 = pneg %p50
      %p57 = scmp.eq.s32.totalorder %s27, 3
      %p58 = por %p56, %p57
      %p59 = scmp.ne.s32.totalorder %s51, %s54
      %p60 = scmp.eq.s32.totalorder %s27, 0
      %p61 = por %p59, %p60
      %p62 = scmp.ne.s32.totalorder %s51, %s54
      %p63 = scmp.eq.s32.totalorder %s32, 3
      %p64 = por %p62, %p63
      %p65 = scmp.ne.s32.totalorder %s54, %s55
      %p66 = scmp.eq.s32.totalorder %s32, 0
      %p67 = por %p65, %p66
      %p68 = scmp.ne.s32.totalorder %s54, %s55
      %p69 = scmp.eq.s32.totalorder %s33, 3
      %p70 = por %p68, %p69
      %p72 = scmp.ne.s32.totalorder %s55, %s71
      %p73 = scmp.eq.s32.totalorder %s33, 0
      %p74 = por %p72, %p73
      %s75 = ssub.s32 %s34, %s46
      %s76 = ssub.s32 %s35, %s42
      %s77 = sor.u32 %s75, %s76
      %p78 = scmp.eq.s32.totalorder %s77, 0
      %s80 = sadd.s32 %s79, 1
      %s81 = scalar_select %p78, %s79, %s80
      %p84 = pneg %p78
      %p85 = scmp.eq.s32.totalorder %s27, 3
      %p86 = por %p84, %p85
      %p87 = scmp.ne.s32.totalorder %s79, %s82
      %p88 = scmp.eq.s32.totalorder %s27, 0
      %p89 = por %p87, %p88
      %p90 = scmp.ne.s32.totalorder %s79, %s82
      %p91 = scmp.eq.s32.totalorder %s32, 3
      %p92 = por %p90, %p91
      %p93 = scmp.ne.s32.totalorder %s82, %s83
      %p94 = scmp.eq.s32.totalorder %s32, 0
      %p95 = por %p93, %p94
      %p96 = scmp.ne.s32.totalorder %s82, %s83
      %p97 = scmp.eq.s32.totalorder %s33, 3
      %p98 = por %p96, %p97
      %p100 = scmp.ne.s32.totalorder %s83, %s99
      %p101 = scmp.eq.s32.totalorder %s33, 0
      %p102 = por %p100, %p101
      %s104 = sadd.s32 %s103, 1
      %p107 = scmp.eq.s32.totalorder %s27, 3
      %p108 = scmp.ne.s32.totalorder %s103, %s105
      %p109 = scmp.eq.s32.totalorder %s27, 0
      %p110 = por %p108, %p109
      %p111 = scmp.ne.s32.totalorder %s103, %s105
      %p112 = scmp.eq.s32.totalorder %s32, 3
      %p113 = por %p111, %p112
      %p114 = scmp.ne.s32.totalorder %s105, %s106
      %p115 = scmp.eq.s32.totalorder %s32, 0
      %p116 = por %p114, %p115
      %p117 = scmp.ne.s32.totalorder %s105, %s106
      %p118 = scmp.eq.s32.totalorder %s33, 3
      %p119 = por %p117, %p118
      %p121 = scmp.ne.s32.totalorder %s106, %s120
      %p122 = scmp.eq.s32.totalorder %s33, 0
      %p123 = por %p121, %p122
      %s124 = ssub.s32 %s34, %s46
      %p125 = scmp.eq.s32.totalorder %s124, 0
      %s127 = sadd.s32 %s126, 1
      %s128 = scalar_select %p125, %s126, %s127
      %p131 = pneg %p125
      %p132 = scmp.eq.s32.totalorder %s27, 3
      %p133 = por %p131, %p132
      %p134 = scmp.ne.s32.totalorder %s126, %s129
      %p135 = scmp.eq.s32.totalorder %s27, 0
      %p136 = por %p134, %p135
      %p137 = scmp.ne.s32.totalorder %s126, %s129
      %p138 = scmp.eq.s32.totalorder %s32, 3
      %p139 = por %p137, %p138
      %p140 = scmp.ne.s32.totalorder %s129, %s130
      %p141 = scmp.eq.s32.totalorder %s32, 0
      %p142 = por %p140, %p141
      %p143 = scmp.ne.s32.totalorder %s129, %s130
      %p144 = scmp.eq.s32.totalorder %s33, 3
      %p145 = por %p143, %p144
      %p147 = scmp.ne.s32.totalorder %s130, %s146
      %p148 = scmp.eq.s32.totalorder %s33, 0
      %p149 = por %p147, %p148
      %s150 = ssub.s32 %s34, %s46
      %p151 = scmp.eq.s32.totalorder %s150, 0
      %s153 = sadd.s32 %s152, 1
      %s154 = scalar_select %p151, %s152, %s153
      %p157 = pneg %p151
      %p158 = scmp.eq.s32.totalorder %s27, 3
      %p159 = por %p157, %p158
      %p160 = scmp.ne.s32.totalorder %s152, %s155
      %p161 = scmp.eq.s32.totalorder %s27, 0
      %p162 = por %p160, %p161
      %p163 = scmp.ne.s32.totalorder %s152, %s155
      %p164 = scmp.eq.s32.totalorder %s32, 3
      %p165 = por %p163, %p164
      %p166 = scmp.ne.s32.totalorder %s155, %s156
      %p167 = scmp.eq.s32.totalorder %s32, 0
      %p168 = por %p166, %p167
      %p169 = scmp.ne.s32.totalorder %s155, %s156
      %p170 = scmp.eq.s32.totalorder %s33, 3
      %p171 = por %p169, %p170
      %p173 = scmp.ne.s32.totalorder %s156, %s172
      %p174 = scmp.eq.s32.totalorder %s33, 0
      %p175 = por %p173, %p174
      %s176 = ssub.s32 %s34, %s46
      %p177 = scmp.eq.s32.totalorder %s176, 0
      %s179 = sadd.s32 %s178, 1
      %s180 = scalar_select %p177, %s178, %s179
      %p183 = pneg %p177
      %p184 = scmp.eq.s32.totalorder %s27, 3
      %p185 = por %p183, %p184
      %p186 = scmp.ne.s32.totalorder %s178, %s181
      %p187 = scmp.eq.s32.totalorder %s27, 0
      %p188 = por %p186, %p187
      %p189 = scmp.ne.s32.totalorder %s178, %s181
      %p190 = scmp.eq.s32.totalorder %s32, 3
      %p191 = por %p189, %p190
      %p192 = scmp.ne.s32.totalorder %s181, %s182
      %p193 = scmp.eq.s32.totalorder %s32, 0
      %p194 = por %p192, %p193
      %p195 = scmp.ne.s32.totalorder %s181, %s182
      %p196 = scmp.eq.s32.totalorder %s33, 3
      %p197 = por %p195, %p196
      %p199 = scmp.ne.s32.totalorder %s182, %s198
      %p200 = scmp.eq.s32.totalorder %s33, 0
      %p201 = por %p199, %p200
      %p202 = scmp.le.s32.totalorder 1, %s27
      %p203 = scmp.lt.s32.totalorder %s27, 5
      %p204 = pnand %p202, %p203
      %p205 = pneg %p204
      // Predicated region
      $region9: #{tpu_custom_call.1} parent=5 // pred_check
        _
      $region10: #{tpu_custom_call.1} parent=5 // pred_check_branch
        %207 = sbr.rel (%p204) target = $region12
      $region11: #{tpu_custom_call.1} parent=5 // pred_region
        %s208 = ssub.s32 %s27, 1
        // Predicated region
        $region13: #{tpu_custom_call.1} parent=11 // pred_check
          %p209 = pneg %p116
        $region14: #{tpu_custom_call.1} parent=11 // pred_check_branch
          %211 = sbr.rel (%p209) target = $region16
        $region15: #{tpu_custom_call.1} parent=11 // pred_region
          %213 = vsyncadd [#allocation8], 0
          %s214 = sshll.u32 %s2, 4
          %s215 = int_to_ptr.hbm [resolvable:$true] %s214
          %s216 = sshll.u32 [#allocation9], 4
          %s217 = int_to_ptr.vmem [resolvable:$true] %s216
          %222 = dma.hbm_to_vmem [thread:$0]  %s215, 2048, %s217, [#allocation8], 128, 128, 8
        $region16: #{tpu_custom_call.1} parent=11 // pred_fallthru
          _
      $region12: #{tpu_custom_call.1} parent=5 // pred_fallthru
        _
      %p223 = scmp.lt.s32.totalorder %s27, 4
      // Predicated region
      $region17: #{tpu_custom_call.1} parent=5 // pred_check
        %p224 = pneg %p223
      $region18: #{tpu_custom_call.1} parent=5 // pred_check_branch
        %226 = sbr.rel (%p224) target = $region20
      $region19: #{tpu_custom_call.1} parent=5 // pred_region
        // Predicated region
        $region21: #{tpu_custom_call.1} parent=19 // pred_check
          %p227 = pneg %p61
        $region22: #{tpu_custom_call.1} parent=19 // pred_check_branch
          %229 = sbr.rel (%p227) target = $region24
        $region23: #{tpu_custom_call.1} parent=19 // pred_region
          #allocation16 [shape = 'u32[6]{0}', space=smem, size = 0x18, scoped, tag = 'DMA stride descriptor']
          %s230 = sand.u32 %s51, 1
          %s231 = scalar_lea.sflag [#allocation5], %s230
          %s232 = sand.u32 %s51, 1
          %s233 = smul.addr %s232, 1024
          %s234 = scalar_lea.vmem [#allocation4], %s233
          %s235 = smul.u32 8, %s34
          %s236 = smul.u32 16, %s35
          %238 = vsyncadd %s231, 0
          %s239 = smul.addr %s235, 32
          %s240 = sadd.s32 %s236, %s239
          %s241 = smul.addr %s240, 8
          %s242 = scalar_lea.hbm %s0, %s241
          %s244 = sshll.u32 1, 14
          %s245 = sxor.u32 4294967295, %s244
          %s247 = sld [smem:[#allocation0]]
          %s248 = sadd.s32 2, %s247
          %s250 = sshll.u32 7, 26
          %s251 = sxor.u32 4294967295, %s250
          %s252 = sand.u32 0, %s251
          %s253 = sshll.u32 %s248, 26
          %s254 = sor.u32 %s252, %s253
          %s255 = sshll.u32 %s242, 4
          %s256 = int_to_ptr.hbm [resolvable:$true] %s255
          %s257 = sshll.u32 %s234, 4
          %s258 = int_to_ptr.vmem [resolvable:$true] %s257
          %264 = sst [smem:[#allocation16]] 4096
          %s265 = scalar_lea.smem [#allocation16], 1
          %266 = sst [smem:[%s265]] 2048
          %s267 = scalar_lea.smem [#allocation16], 2
          %268 = sst [smem:[%s267]] 16
          %s269 = scalar_lea.smem [#allocation16], 3
          %270 = sst [smem:[%s269]] 128
          %s271 = scalar_lea.smem [#allocation16], 4
          %272 = sst [smem:[%s271]] 128
          %s273 = scalar_lea.smem [#allocation16], 5
          %274 = sst [smem:[%s273]] 8
          %276 = dma.general %s256, 16384, %s258, %s231, [#allocation15], [#allocation16], %s254, 0
        $region24: #{tpu_custom_call.1} parent=19 // pred_fallthru
          _
        // Predicated region
        $region25: #{tpu_custom_call.1} parent=19 // pred_check
          %p277 = pneg %p89
        $region26: #{tpu_custom_call.1} parent=19 // pred_check_branch
          %279 = sbr.rel (%p277) target = $region28
        $region27: #{tpu_custom_call.1} parent=19 // pred_region
          %s280 = sand.u32 %s27, 1
          %s281 = scalar_lea.sflag [#allocation8], %s280
          %s282 = sand.u32 %s79, 1
          %s283 = smul.addr %s282, 8
          %s284 = scalar_lea.vmem [#allocation7], %s283
          %286 = vsyncadd %s281, 0
          %s287 = smul.addr %s34, 2
          %s288 = sadd.s32 %s35, %s287
          %s289 = smul.addr %s288, 8
          %s290 = scalar_lea.hbm %s1, %s289
          %s292 = sshll.u32 %s290, 4
          %s293 = int_to_ptr.hbm [resolvable:$true] %s292
          %s294 = sshll.u32 %s284, 4
          %s295 = int_to_ptr.vmem [resolvable:$true] %s294
          %297 = dma.hbm_to_vmem [thread:$0]  %s293, 128, %s295, %s281
        $region28: #{tpu_custom_call.1} parent=19 // pred_fallthru
          _
        // Predicated region
        $region29: #{tpu_custom_call.1} parent=19 // pred_check
          %p298 = pneg %p136
        $region30: #{tpu_custom_call.1} parent=19 // pred_check_branch
          %300 = sbr.rel (%p298) target = $region32
        $region31: #{tpu_custom_call.1} parent=19 // pred_region
          %s301 = sand.u32 %s126, 1
          %s302 = scalar_lea.sflag [#allocation11], %s301
          %s303 = sand.u32 %s126, 1
          %s304 = smul.addr %s303, 8
          %s305 = scalar_lea.vmem [#allocation10], %s304
          %307 = vsyncadd %s302, 0
          %s308 = smul.addr %s34, 8
          %s309 = scalar_lea.hbm %s3, %s308
          %s311 = sshll.u32 %s309, 4
          %s312 = int_to_ptr.hbm [resolvable:$true] %s311
          %s313 = sshll.u32 %s305, 4
          %s314 = int_to_ptr.vmem [resolvable:$true] %s313
          %316 = dma.hbm_to_vmem [thread:$0]  %s312, 128, %s314, %s302
        $region32: #{tpu_custom_call.1} parent=19 // pred_fallthru
          _
      $region20: #{tpu_custom_call.1} parent=5 // pred_fallthru
        _
      %p317 = scmp.le.s32.totalorder 1, %s27
      %p318 = scmp.lt.s32.totalorder %s27, 5
      %p319 = pnand %p317, %p318
      %p320 = pneg %p319
      // Predicated region
      $region33: #{tpu_custom_call.1} parent=5 // pred_check
        _
      $region34: #{tpu_custom_call.1} parent=5 // pred_check_branch
        %322 = sbr.rel (%p319) target = $region36
      $region35: #{tpu_custom_call.1} parent=5 // pred_region
        %s323 = ssub.s32 %s27, 1
        %s324 = sand.u32 %s54, 1
        %s325 = scalar_lea.sflag [#allocation5], %s324
        %s326 = sand.u32 %s54, 1
        %s327 = smul.addr %s326, 1024
        %s328 = scalar_lea.vmem [#allocation4], %s327
        // Predicated region
        $region37: #{tpu_custom_call.1} parent=35 // pred_check
          %p329 = pneg %p67
        $region38: #{tpu_custom_call.1} parent=35 // pred_check_branch
          %331 = sbr.rel (%p329) target = $region40
        $region39: #{tpu_custom_call.1} parent=35 // pred_region
          %333 = dma.done %s325, 16384
        $region40: #{tpu_custom_call.1} parent=35 // pred_fallthru
          _
        %s334 = sand.u32 %s32, 1
        %s335 = scalar_lea.sflag [#allocation8], %s334
        %s336 = sand.u32 %s82, 1
        %s337 = smul.addr %s336, 8
        %s338 = scalar_lea.vmem [#allocation7], %s337
        // Predicated region
        $region41: #{tpu_custom_call.1} parent=35 // pred_check
          %p339 = pneg %p95
        $region42: #{tpu_custom_call.1} parent=35 // pred_check_branch
          %341 = sbr.rel (%p339) target = $region44
        $region43: #{tpu_custom_call.1} parent=35 // pred_region
          %343 = dma.done %s335, 128
        $region44: #{tpu_custom_call.1} parent=35 // pred_fallthru
          _
        // Predicated region
        $region45: #{tpu_custom_call.1} parent=35 // pred_check
          %p344 = pneg %p116
        $region46: #{tpu_custom_call.1} parent=35 // pred_check_branch
          %346 = sbr.rel (%p344) target = $region48
        $region47: #{tpu_custom_call.1} parent=35 // pred_region
          %348 = dma.done [#allocation8], 2048
        $region48: #{tpu_custom_call.1} parent=35 // pred_fallthru
          _
        %s349 = sand.u32 %s129, 1
        %s350 = scalar_lea.sflag [#allocation11], %s349
        %s351 = sand.u32 %s129, 1
        %s352 = smul.addr %s351, 8
        %s353 = scalar_lea.vmem [#allocation10], %s352
        // Predicated region
        $region49: #{tpu_custom_call.1} parent=35 // pred_check
          %p354 = pneg %p142
        $region50: #{tpu_custom_call.1} parent=35 // pred_check_branch
          %356 = sbr.rel (%p354) target = $region52
        $region51: #{tpu_custom_call.1} parent=35 // pred_region
          %358 = dma.done %s350, 128
        $region52: #{tpu_custom_call.1} parent=35 // pred_fallthru
          _
        %s359 = sand.u32 %s54, 1
        %s360 = scalar_lea.sflag [#allocation5], %s359
        %s361 = sand.u32 %s54, 1
        %s362 = smul.addr %s361, 1024
        %s363 = scalar_lea.vmem [#allocation4], %s362
        %p364 = pneg %p67
        %p365 = pneg %p64
        %s366 = sand.u32 %s32, 1
        %s367 = scalar_lea.sflag [#allocation8], %s366
        %s368 = sand.u32 %s82, 1
        %s369 = smul.addr %s368, 8
        %s370 = scalar_lea.vmem [#allocation7], %s369
        %p371 = pneg %p95
        %p372 = pneg %p92
        %p373 = pneg %p116
        %p374 = pneg %p113
        %s375 = sand.u32 %s129, 1
        %s376 = scalar_lea.sflag [#allocation11], %s375
        %s377 = sand.u32 %s129, 1
        %s378 = smul.addr %s377, 8
        %s379 = scalar_lea.vmem [#allocation10], %s378
        %p380 = pneg %p142
        %p381 = pneg %p139
        %p382 = pneg %p168
        %p383 = pneg %p165
        %s384 = sand.u32 %s155, 1
        %s385 = scalar_lea.sflag [#allocation6], %s384
        %s386 = sand.u32 %s155, 1
        %s387 = smul.addr %s386, 8
        %s388 = scalar_lea.vmem [#allocation12], %s387
        %p389 = pneg %p194
        %p390 = pneg %p191
        %s391 = sand.u32 %s181, 1
        %s392 = scalar_lea.sflag [#allocation14], %s391
        %s393 = sand.u32 %s181, 1
        %s394 = scalar_lea.vmem [#allocation13], %s393
        %s395 = smul.u32 8, %s36
        %s396 = smul.u32 16, %s37
        %p397 = scmp.eq.s32.totalorder %s37, 0
        // Predicated region
        $region53: #{tpu_custom_call.1} parent=35 // pred_check
          %p398 = pneg %p397
        $region54: #{tpu_custom_call.1} parent=35 // pred_check_branch
          %400 = sbr.rel (%p398) target = $region56
        $region55: #{tpu_custom_call.1} parent=35 // pred_region
          %401 = vst [vmem:[#allocation2] sm:$0xff] 0.0
          %vm402 = vcmask 7168
          %403 = vst.msk [vmem:[#allocation3] sm:$0xff] %vm402, 0.0
        $region56: #{tpu_custom_call.1} parent=35 // pred_fallthru
          _
        %v404 = vld [vmem:[%s328] sm:$0xff]
        %v405 = vld [vmem:[%s328 + $0x8] sm:$0xff]
        %v406 = vld [vmem:[%s328 + $0x10] sm:$0xff]
        %v407 = vld [vmem:[%s328 + $0x18] sm:$0xff]
        %v408 = vld [vmem:[%s328 + $0x20] sm:$0xff]
        %v409 = vld [vmem:[%s328 + $0x28] sm:$0xff]
        %v410 = vld [vmem:[%s328 + $0x30] sm:$0xff]
        %v411 = vld [vmem:[%s328 + $0x38] sm:$0xff]
        %v412 = vld [vmem:[%s328 + $0x40] sm:$0xff]
        %v413 = vld [vmem:[%s328 + $0x48] sm:$0xff]
        %v414 = vld [vmem:[%s328 + $0x50] sm:$0xff]
        %v415 = vld [vmem:[%s328 + $0x58] sm:$0xff]
        %v416 = vld [vmem:[%s328 + $0x60] sm:$0xff]
        %v417 = vld [vmem:[%s328 + $0x68] sm:$0xff]
        %v418 = vld [vmem:[%s328 + $0x70] sm:$0xff]
        %v419 = vld [vmem:[%s328 + $0x78] sm:$0xff]
        %v420 = vld [vmem:[%s328 + $0x80] sm:$0xff]
        %v421 = vld [vmem:[%s328 + $0x88] sm:$0xff]
        %v422 = vld [vmem:[%s328 + $0x90] sm:$0xff]
        %v423 = vld [vmem:[%s328 + $0x98] sm:$0xff]
        %v424 = vld [vmem:[%s328 + $0xa0] sm:$0xff]
        %v425 = vld [vmem:[%s328 + $0xa8] sm:$0xff]
        %v426 = vld [vmem:[%s328 + $0xb0] sm:$0xff]
        %v427 = vld [vmem:[%s328 + $0xb8] sm:$0xff]
        %v428 = vld [vmem:[%s328 + $0xc0] sm:$0xff]
        %v429 = vld [vmem:[%s328 + $0xc8] sm:$0xff]
        %v430 = vld [vmem:[%s328 + $0xd0] sm:$0xff]
        %v431 = vld [vmem:[%s328 + $0xd8] sm:$0xff]
        %v432 = vld [vmem:[%s328 + $0xe0] sm:$0xff]
        %v433 = vld [vmem:[%s328 + $0xe8] sm:$0xff]
        %v434 = vld [vmem:[%s328 + $0xf0] sm:$0xff]
        %v435 = vld [vmem:[%s328 + $0xf8] sm:$0xff]
        %v436 = vld [vmem:[%s328 + $0x100] sm:$0xff]
        %v437 = vld [vmem:[%s328 + $0x108] sm:$0xff]
        %v438 = vld [vmem:[%s328 + $0x110] sm:$0xff]
        %v439 = vld [vmem:[%s328 + $0x118] sm:$0xff]
        %v440 = vld [vmem:[%s328 + $0x120] sm:$0xff]
        %v441 = vld [vmem:[%s328 + $0x128] sm:$0xff]
        %v442 = vld [vmem:[%s328 + $0x130] sm:$0xff]
        %v443 = vld [vmem:[%s328 + $0x138] sm:$0xff]
        %v444 = vld [vmem:[%s328 + $0x140] sm:$0xff]
        %v445 = vld [vmem:[%s328 + $0x148] sm:$0xff]
        %v446 = vld [vmem:[%s328 + $0x150] sm:$0xff]
        %v447 = vld [vmem:[%s328 + $0x158] sm:$0xff]
        %v448 = vld [vmem:[%s328 + $0x160] sm:$0xff]
        %v449 = vld [vmem:[%s328 + $0x168] sm:$0xff]
        %v450 = vld [vmem:[%s328 + $0x170] sm:$0xff]
        %v451 = vld [vmem:[%s328 + $0x178] sm:$0xff]
        %v452 = vld [vmem:[%s328 + $0x180] sm:$0xff]
        %v453 = vld [vmem:[%s328 + $0x188] sm:$0xff]
        %v454 = vld [vmem:[%s328 + $0x190] sm:$0xff]
        %v455 = vld [vmem:[%s328 + $0x198] sm:$0xff]
        %v456 = vld [vmem:[%s328 + $0x1a0] sm:$0xff]
        %v457 = vld [vmem:[%s328 + $0x1a8] sm:$0xff]
        %v458 = vld [vmem:[%s328 + $0x1b0] sm:$0xff]
        %v459 = vld [vmem:[%s328 + $0x1b8] sm:$0xff]
        %v460 = vld [vmem:[%s328 + $0x1c0] sm:$0xff]
        %v461 = vld [vmem:[%s328 + $0x1c8] sm:$0xff]
        %v462 = vld [vmem:[%s328 + $0x1d0] sm:$0xff]
        %v463 = vld [vmem:[%s328 + $0x1d8] sm:$0xff]
        %v464 = vld [vmem:[%s328 + $0x1e0] sm:$0xff]
        %v465 = vld [vmem:[%s328 + $0x1e8] sm:$0xff]
        %v466 = vld [vmem:[%s328 + $0x1f0] sm:$0xff]
        %v467 = vld [vmem:[%s328 + $0x1f8] sm:$0xff]
        %v468 = vld [vmem:[%s328 + $0x200] sm:$0xff]
        %v469 = vld [vmem:[%s328 + $0x208] sm:$0xff]
        %v470 = vld [vmem:[%s328 + $0x210] sm:$0xff]
        %v471 = vld [vmem:[%s328 + $0x218] sm:$0xff]
        %v472 = vld [vmem:[%s328 + $0x220] sm:$0xff]
        %v473 = vld [vmem:[%s328 + $0x228] sm:$0xff]
        %v474 = vld [vmem:[%s328 + $0x230] sm:$0xff]
        %v475 = vld [vmem:[%s328 + $0x238] sm:$0xff]
        %v476 = vld [vmem:[%s328 + $0x240] sm:$0xff]
        %v477 = vld [vmem:[%s328 + $0x248] sm:$0xff]
        %v478 = vld [vmem:[%s328 + $0x250] sm:$0xff]
        %v479 = vld [vmem:[%s328 + $0x258] sm:$0xff]
        %v480 = vld [vmem:[%s328 + $0x260] sm:$0xff]
        %v481 = vld [vmem:[%s328 + $0x268] sm:$0xff]
        %v482 = vld [vmem:[%s328 + $0x270] sm:$0xff]
        %v483 = vld [vmem:[%s328 + $0x278] sm:$0xff]
        %v484 = vld [vmem:[%s328 + $0x280] sm:$0xff]
        %v485 = vld [vmem:[%s328 + $0x288] sm:$0xff]
        %v486 = vld [vmem:[%s328 + $0x290] sm:$0xff]
        %v487 = vld [vmem:[%s328 + $0x298] sm:$0xff]
        %v488 = vld [vmem:[%s328 + $0x2a0] sm:$0xff]
        %v489 = vld [vmem:[%s328 + $0x2a8] sm:$0xff]
        %v490 = vld [vmem:[%s328 + $0x2b0] sm:$0xff]
        %v491 = vld [vmem:[%s328 + $0x2b8] sm:$0xff]
        %v492 = vld [vmem:[%s328 + $0x2c0] sm:$0xff]
        %v493 = vld [vmem:[%s328 + $0x2c8] sm:$0xff]
        %v494 = vld [vmem:[%s328 + $0x2d0] sm:$0xff]
        %v495 = vld [vmem:[%s328 + $0x2d8] sm:$0xff]
        %v496 = vld [vmem:[%s328 + $0x2e0] sm:$0xff]
        %v497 = vld [vmem:[%s328 + $0x2e8] sm:$0xff]
        %v498 = vld [vmem:[%s328 + $0x2f0] sm:$0xff]
        %v499 = vld [vmem:[%s328 + $0x2f8] sm:$0xff]
        %v500 = vld [vmem:[%s328 + $0x300] sm:$0xff]
        %v501 = vld [vmem:[%s328 + $0x308] sm:$0xff]
        %v502 = vld [vmem:[%s328 + $0x310] sm:$0xff]
        %v503 = vld [vmem:[%s328 + $0x318] sm:$0xff]
        %v504 = vld [vmem:[%s328 + $0x320] sm:$0xff]
        %v505 = vld [vmem:[%s328 + $0x328] sm:$0xff]
        %v506 = vld [vmem:[%s328 + $0x330] sm:$0xff]
        %v507 = vld [vmem:[%s328 + $0x338] sm:$0xff]
        %v508 = vld [vmem:[%s328 + $0x340] sm:$0xff]
        %v509 = vld [vmem:[%s328 + $0x348] sm:$0xff]
        %v510 = vld [vmem:[%s328 + $0x350] sm:$0xff]
        %v511 = vld [vmem:[%s328 + $0x358] sm:$0xff]
        %v512 = vld [vmem:[%s328 + $0x360] sm:$0xff]
        %v513 = vld [vmem:[%s328 + $0x368] sm:$0xff]
        %v514 = vld [vmem:[%s328 + $0x370] sm:$0xff]
        %v515 = vld [vmem:[%s328 + $0x378] sm:$0xff]
        %v516 = vld [vmem:[%s328 + $0x380] sm:$0xff]
        %v517 = vld [vmem:[%s328 + $0x388] sm:$0xff]
        %v518 = vld [vmem:[%s328 + $0x390] sm:$0xff]
        %v519 = vld [vmem:[%s328 + $0x398] sm:$0xff]
        %v520 = vld [vmem:[%s328 + $0x3a0] sm:$0xff]
        %v521 = vld [vmem:[%s328 + $0x3a8] sm:$0xff]
        %v522 = vld [vmem:[%s328 + $0x3b0] sm:$0xff]
        %v523 = vld [vmem:[%s328 + $0x3b8] sm:$0xff]
        %v524 = vld [vmem:[%s328 + $0x3c0] sm:$0xff]
        %v525 = vld [vmem:[%s328 + $0x3c8] sm:$0xff]
        %v526 = vld [vmem:[%s328 + $0x3d0] sm:$0xff]
        %v527 = vld [vmem:[%s328 + $0x3d8] sm:$0xff]
        %v528 = vld [vmem:[%s328 + $0x3e0] sm:$0xff]
        %v529 = vld [vmem:[%s328 + $0x3e8] sm:$0xff]
        %v530 = vld [vmem:[%s328 + $0x3f0] sm:$0xff]
        %v531 = vld [vmem:[%s328 + $0x3f8] sm:$0xff]
        %v532 = vld [vmem:[%s338] sm:$0xff]
        %v533 = vld [vmem:[#allocation2] sm:$0xff]
        %v534 = vperm.slane %v532, 0
        %v535 = vlaneseq
        %v536 = vshrl.u32 %v535, 7
        %538 = vset.pattern.permute.xlu0 %v536
        %539 = vperm.xlu0 %538, %v534
        %v540 = vpop.permute.xlu0 %539
        %v541 = vlaneseq
        %v542 = vshrl.u32 %v541, 7
        %v543 = vadd.s32 %v542, 8
        %544 = vset.pattern.permute.xlu0 %v543
        %545 = vperm.xlu0 %544, %v534
        %v546 = vpop.permute.xlu0 %545
        %v547 = vlaneseq
        %v548 = vshrl.u32 %v547, 7
        %v549 = vadd.s32 %v548, 16
        %550 = vset.pattern.permute.xlu0 %v549
        %551 = vperm.xlu0 %550, %v534
        %v552 = vpop.permute.xlu0 %551
        %v553 = vlaneseq
        %v554 = vshrl.u32 %v553, 7
        %v555 = vadd.s32 %v554, 24
        %556 = vset.pattern.permute.xlu0 %v555
        %557 = vperm.xlu0 %556, %v534
        %v558 = vpop.permute.xlu0 %557
        %v559 = vlaneseq
        %v560 = vshrl.u32 %v559, 7
        %v561 = vadd.s32 %v560, 32
        %562 = vset.pattern.permute.xlu0 %v561
        %563 = vperm.xlu0 %562, %v534
        %v564 = vpop.permute.xlu0 %563
        %v565 = vlaneseq
        %v566 = vshrl.u32 %v565, 7
        %v567 = vadd.s32 %v566, 40
        %568 = vset.pattern.permute.xlu0 %v567
        %569 = vperm.xlu0 %568, %v534
        %v570 = vpop.permute.xlu0 %569
        %v571 = vlaneseq
        %v572 = vshrl.u32 %v571, 7
        %v573 = vadd.s32 %v572, 48
        %574 = vset.pattern.permute.xlu0 %v573
        %575 = vperm.xlu0 %574, %v534
        %v576 = vpop.permute.xlu0 %575
        %v577 = vlaneseq
        %v578 = vshrl.u32 %v577, 7
        %v579 = vadd.s32 %v578, 56
        %580 = vset.pattern.permute.xlu0 %v579
        %581 = vperm.xlu0 %580, %v534
        %v582 = vpop.permute.xlu0 %581
        %v583 = vlaneseq
        %v584 = vshrl.u32 %v583, 7
        %v585 = vadd.s32 %v584, 64
        %586 = vset.pattern.permute.xlu0 %v585
        %587 = vperm.xlu0 %586, %v534
        %v588 = vpop.permute.xlu0 %587
        %v589 = vlaneseq
        %v590 = vshrl.u32 %v589, 7
        %v591 = vadd.s32 %v590, 72
        %592 = vset.pattern.permute.xlu0 %v591
        %593 = vperm.xlu0 %592, %v534
        %v594 = vpop.permute.xlu0 %593
        %v595 = vlaneseq
        %v596 = vshrl.u32 %v595, 7
        %v597 = vadd.s32 %v596, 80
        %598 = vset.pattern.permute.xlu0 %v597
        %599 = vperm.xlu0 %598, %v534
        %v600 = vpop.permute.xlu0 %599
        %v601 = vlaneseq
        %v602 = vshrl.u32 %v601, 7
        %v603 = vadd.s32 %v602, 88
        %604 = vset.pattern.permute.xlu0 %v603
        %605 = vperm.xlu0 %604, %v534
        %v606 = vpop.permute.xlu0 %605
        %v607 = vlaneseq
        %v608 = vshrl.u32 %v607, 7
        %v609 = vadd.s32 %v608, 96
        %610 = vset.pattern.permute.xlu0 %v609
        %611 = vperm.xlu0 %610, %v534
        %v612 = vpop.permute.xlu0 %611
        %v613 = vlaneseq
        %v614 = vshrl.u32 %v613, 7
        %v615 = vadd.s32 %v614, 104
        %616 = vset.pattern.permute.xlu0 %v615
        %617 = vperm.xlu0 %616, %v534
        %v618 = vpop.permute.xlu0 %617
        %v619 = vlaneseq
        %v620 = vshrl.u32 %v619, 7
        %v621 = vadd.s32 %v620, 112
        %622 = vset.pattern.permute.xlu0 %v621
        %623 = vperm.xlu0 %622, %v534
        %v624 = vpop.permute.xlu0 %623
        %v625 = vlaneseq
        %v626 = vshrl.u32 %v625, 7
        %v627 = vadd.s32 %v626, 120
        %628 = vset.pattern.permute.xlu0 %v627
        %629 = vperm.xlu0 %628, %v534
        %v630 = vpop.permute.xlu0 %629
        %v631 = vperm.slane %v532, 1
        %v632 = vlaneseq
        %v633 = vshrl.u32 %v632, 7
        %635 = vset.pattern.permute.xlu0 %v633
        %636 = vperm.xlu0 %635, %v631
        %v637 = vpop.permute.xlu0 %636
        %v638 = vlaneseq
        %v639 = vshrl.u32 %v638, 7
        %v640 = vadd.s32 %v639, 8
        %641 = vset.pattern.permute.xlu0 %v640
        %642 = vperm.xlu0 %641, %v631
        %v643 = vpop.permute.xlu0 %642
        %v644 = vlaneseq
        %v645 = vshrl.u32 %v644, 7
        %v646 = vadd.s32 %v645, 16
        %647 = vset.pattern.permute.xlu0 %v646
        %648 = vperm.xlu0 %647, %v631
        %v649 = vpop.permute.xlu0 %648
        %v650 = vlaneseq
        %v651 = vshrl.u32 %v650, 7
        %v652 = vadd.s32 %v651, 24
        %653 = vset.pattern.permute.xlu0 %v652
        %654 = vperm.xlu0 %653, %v631
        %v655 = vpop.permute.xlu0 %654
        %v656 = vlaneseq
        %v657 = vshrl.u32 %v656, 7
        %v658 = vadd.s32 %v657, 32
        %659 = vset.pattern.permute.xlu0 %v658
        %660 = vperm.xlu0 %659, %v631
        %v661 = vpop.permute.xlu0 %660
        %v662 = vlaneseq
        %v663 = vshrl.u32 %v662, 7
        %v664 = vadd.s32 %v663, 40
        %665 = vset.pattern.permute.xlu0 %v664
        %666 = vperm.xlu0 %665, %v631
        %v667 = vpop.permute.xlu0 %666
        %v668 = vlaneseq
        %v669 = vshrl.u32 %v668, 7
        %v670 = vadd.s32 %v669, 48
        %671 = vset.pattern.permute.xlu0 %v670
        %672 = vperm.xlu0 %671, %v631
        %v673 = vpop.permute.xlu0 %672
        %v674 = vlaneseq
        %v675 = vshrl.u32 %v674, 7
        %v676 = vadd.s32 %v675, 56
        %677 = vset.pattern.permute.xlu0 %v676
        %678 = vperm.xlu0 %677, %v631
        %v679 = vpop.permute.xlu0 %678
        %v680 = vlaneseq
        %v681 = vshrl.u32 %v680, 7
        %v682 = vadd.s32 %v681, 64
        %683 = vset.pattern.permute.xlu0 %v682
        %684 = vperm.xlu0 %683, %v631
        %v685 = vpop.permute.xlu0 %684
        %v686 = vlaneseq
        %v687 = vshrl.u32 %v686, 7
        %v688 = vadd.s32 %v687, 72
        %689 = vset.pattern.permute.xlu0 %v688
        %690 = vperm.xlu0 %689, %v631
        %v691 = vpop.permute.xlu0 %690
        %v692 = vlaneseq
        %v693 = vshrl.u32 %v692, 7
        %v694 = vadd.s32 %v693, 80
        %695 = vset.pattern.permute.xlu0 %v694
        %696 = vperm.xlu0 %695, %v631
        %v697 = vpop.permute.xlu0 %696
        %v698 = vlaneseq
        %v699 = vshrl.u32 %v698, 7
        %v700 = vadd.s32 %v699, 88
        %701 = vset.pattern.permute.xlu0 %v700
        %702 = vperm.xlu0 %701, %v631
        %v703 = vpop.permute.xlu0 %702
        %v704 = vlaneseq
        %v705 = vshrl.u32 %v704, 7
        %v706 = vadd.s32 %v705, 96
        %707 = vset.pattern.permute.xlu0 %v706
        %708 = vperm.xlu0 %707, %v631
        %v709 = vpop.permute.xlu0 %708
        %v710 = vlaneseq
        %v711 = vshrl.u32 %v710, 7
        %v712 = vadd.s32 %v711, 104
        %713 = vset.pattern.permute.xlu0 %v712
        %714 = vperm.xlu0 %713, %v631
        %v715 = vpop.permute.xlu0 %714
        %v716 = vlaneseq
        %v717 = vshrl.u32 %v716, 7
        %v718 = vadd.s32 %v717, 112
        %719 = vset.pattern.permute.xlu0 %v718
        %720 = vperm.xlu0 %719, %v631
        %v721 = vpop.permute.xlu0 %720
        %v722 = vlaneseq
        %v723 = vshrl.u32 %v722, 7
        %v724 = vadd.s32 %v723, 120
        %725 = vset.pattern.permute.xlu0 %v724
        %726 = vperm.xlu0 %725, %v631
        %v727 = vpop.permute.xlu0 %726
        %v728 = vperm.slane %v532, 2
        %v729 = vlaneseq
        %v730 = vshrl.u32 %v729, 7
        %732 = vset.pattern.permute.xlu0 %v730
        %733 = vperm.xlu0 %732, %v728
        %v734 = vpop.permute.xlu0 %733
        %v735 = vlaneseq
        %v736 = vshrl.u32 %v735, 7
        %v737 = vadd.s32 %v736, 8
        %738 = vset.pattern.permute.xlu0 %v737
        %739 = vperm.xlu0 %738, %v728
        %v740 = vpop.permute.xlu0 %739
        %v741 = vlaneseq
        %v742 = vshrl.u32 %v741, 7
        %v743 = vadd.s32 %v742, 16
        %744 = vset.pattern.permute.xlu0 %v743
        %745 = vperm.xlu0 %744, %v728
        %v746 = vpop.permute.xlu0 %745
        %v747 = vlaneseq
        %v748 = vshrl.u32 %v747, 7
        %v749 = vadd.s32 %v748, 24
        %750 = vset.pattern.permute.xlu0 %v749
        %751 = vperm.xlu0 %750, %v728
        %v752 = vpop.permute.xlu0 %751
        %v753 = vlaneseq
        %v754 = vshrl.u32 %v753, 7
        %v755 = vadd.s32 %v754, 32
        %756 = vset.pattern.permute.xlu0 %v755
        %757 = vperm.xlu0 %756, %v728
        %v758 = vpop.permute.xlu0 %757
        %v759 = vlaneseq
        %v760 = vshrl.u32 %v759, 7
        %v761 = vadd.s32 %v760, 40
        %762 = vset.pattern.permute.xlu0 %v761
        %763 = vperm.xlu0 %762, %v728
        %v764 = vpop.permute.xlu0 %763
        %v765 = vlaneseq
        %v766 = vshrl.u32 %v765, 7
        %v767 = vadd.s32 %v766, 48
        %768 = vset.pattern.permute.xlu0 %v767
        %769 = vperm.xlu0 %768, %v728
        %v770 = vpop.permute.xlu0 %769
        %v771 = vlaneseq
        %v772 = vshrl.u32 %v771, 7
        %v773 = vadd.s32 %v772, 56
        %774 = vset.pattern.permute.xlu0 %v773
        %775 = vperm.xlu0 %774, %v728
        %v776 = vpop.permute.xlu0 %775
        %v777 = vlaneseq
        %v778 = vshrl.u32 %v777, 7
        %v779 = vadd.s32 %v778, 64
        %780 = vset.pattern.permute.xlu0 %v779
        %781 = vperm.xlu0 %780, %v728
        %v782 = vpop.permute.xlu0 %781
        %v783 = vlaneseq
        %v784 = vshrl.u32 %v783, 7
        %v785 = vadd.s32 %v784, 72
        %786 = vset.pattern.permute.xlu0 %v785
        %787 = vperm.xlu0 %786, %v728
        %v788 = vpop.permute.xlu0 %787
        %v789 = vlaneseq
        %v790 = vshrl.u32 %v789, 7
        %v791 = vadd.s32 %v790, 80
        %792 = vset.pattern.permute.xlu0 %v791
        %793 = vperm.xlu0 %792, %v728
        %v794 = vpop.permute.xlu0 %793
        %v795 = vlaneseq
        %v796 = vshrl.u32 %v795, 7
        %v797 = vadd.s32 %v796, 88
        %798 = vset.pattern.permute.xlu0 %v797
        %799 = vperm.xlu0 %798, %v728
        %v800 = vpop.permute.xlu0 %799
        %v801 = vlaneseq
        %v802 = vshrl.u32 %v801, 7
        %v803 = vadd.s32 %v802, 96
        %804 = vset.pattern.permute.xlu0 %v803
        %805 = vperm.xlu0 %804, %v728
        %v806 = vpop.permute.xlu0 %805
        %v807 = vlaneseq
        %v808 = vshrl.u32 %v807, 7
        %v809 = vadd.s32 %v808, 104
        %810 = vset.pattern.permute.xlu0 %v809
        %811 = vperm.xlu0 %810, %v728
        %v812 = vpop.permute.xlu0 %811
        %v813 = vlaneseq
        %v814 = vshrl.u32 %v813, 7
        %v815 = vadd.s32 %v814, 112
        %816 = vset.pattern.permute.xlu0 %v815
        %817 = vperm.xlu0 %816, %v728
        %v818 = vpop.permute.xlu0 %817
        %v819 = vlaneseq
        %v820 = vshrl.u32 %v819, 7
        %v821 = vadd.s32 %v820, 120
        %822 = vset.pattern.permute.xlu0 %v821
        %823 = vperm.xlu0 %822, %v728
        %v824 = vpop.permute.xlu0 %823
        %v825 = vperm.slane %v532, 3
        %v826 = vlaneseq
        %v827 = vshrl.u32 %v826, 7
        %829 = vset.pattern.permute.xlu0 %v827
        %830 = vperm.xlu0 %829, %v825
        %v831 = vpop.permute.xlu0 %830
        %v832 = vlaneseq
        %v833 = vshrl.u32 %v832, 7
        %v834 = vadd.s32 %v833, 8
        %835 = vset.pattern.permute.xlu0 %v834
        %836 = vperm.xlu0 %835, %v825
        %v837 = vpop.permute.xlu0 %836
        %v838 = vlaneseq
        %v839 = vshrl.u32 %v838, 7
        %v840 = vadd.s32 %v839, 16
        %841 = vset.pattern.permute.xlu0 %v840
        %842 = vperm.xlu0 %841, %v825
        %v843 = vpop.permute.xlu0 %842
        %v844 = vlaneseq
        %v845 = vshrl.u32 %v844, 7
        %v846 = vadd.s32 %v845, 24
        %847 = vset.pattern.permute.xlu0 %v846
        %848 = vperm.xlu0 %847, %v825
        %v849 = vpop.permute.xlu0 %848
        %v850 = vlaneseq
        %v851 = vshrl.u32 %v850, 7
        %v852 = vadd.s32 %v851, 32
        %853 = vset.pattern.permute.xlu0 %v852
        %854 = vperm.xlu0 %853, %v825
        %v855 = vpop.permute.xlu0 %854
        %v856 = vlaneseq
        %v857 = vshrl.u32 %v856, 7
        %v858 = vadd.s32 %v857, 40
        %859 = vset.pattern.permute.xlu0 %v858
        %860 = vperm.xlu0 %859, %v825
        %v861 = vpop.permute.xlu0 %860
        %v862 = vlaneseq
        %v863 = vshrl.u32 %v862, 7
        %v864 = vadd.s32 %v863, 48
        %865 = vset.pattern.permute.xlu0 %v864
        %866 = vperm.xlu0 %865, %v825
        %v867 = vpop.permute.xlu0 %866
        %v868 = vlaneseq
        %v869 = vshrl.u32 %v868, 7
        %v870 = vadd.s32 %v869, 56
        %871 = vset.pattern.permute.xlu0 %v870
        %872 = vperm.xlu0 %871, %v825
        %v873 = vpop.permute.xlu0 %872
        %v874 = vlaneseq
        %v875 = vshrl.u32 %v874, 7
        %v876 = vadd.s32 %v875, 64
        %877 = vset.pattern.permute.xlu0 %v876
        %878 = vperm.xlu0 %877, %v825
        %v879 = vpop.permute.xlu0 %878
        %v880 = vlaneseq
        %v881 = vshrl.u32 %v880, 7
        %v882 = vadd.s32 %v881, 72
        %883 = vset.pattern.permute.xlu0 %v882
        %884 = vperm.xlu0 %883, %v825
        %v885 = vpop.permute.xlu0 %884
        %v886 = vlaneseq
        %v887 = vshrl.u32 %v886, 7
        %v888 = vadd.s32 %v887, 80
        %889 = vset.pattern.permute.xlu0 %v888
        %890 = vperm.xlu0 %889, %v825
        %v891 = vpop.permute.xlu0 %890
        %v892 = vlaneseq
        %v893 = vshrl.u32 %v892, 7
        %v894 = vadd.s32 %v893, 88
        %895 = vset.pattern.permute.xlu0 %v894
        %896 = vperm.xlu0 %895, %v825
        %v897 = vpop.permute.xlu0 %896
        %v898 = vlaneseq
        %v899 = vshrl.u32 %v898, 7
        %v900 = vadd.s32 %v899, 96
        %901 = vset.pattern.permute.xlu0 %v900
        %902 = vperm.xlu0 %901, %v825
        %v903 = vpop.permute.xlu0 %902
        %v904 = vlaneseq
        %v905 = vshrl.u32 %v904, 7
        %v906 = vadd.s32 %v905, 104
        %907 = vset.pattern.permute.xlu0 %v906
        %908 = vperm.xlu0 %907, %v825
        %v909 = vpop.permute.xlu0 %908
        %v910 = vlaneseq
        %v911 = vshrl.u32 %v910, 7
        %v912 = vadd.s32 %v911, 112
        %913 = vset.pattern.permute.xlu0 %v912
        %914 = vperm.xlu0 %913, %v825
        %v915 = vpop.permute.xlu0 %914
        %v916 = vlaneseq
        %v917 = vshrl.u32 %v916, 7
        %v918 = vadd.s32 %v917, 120
        %919 = vset.pattern.permute.xlu0 %v918
        %920 = vperm.xlu0 %919, %v825
        %v921 = vpop.permute.xlu0 %920
        %v922 = vperm.slane %v532, 4
        %v923 = vlaneseq
        %v924 = vshrl.u32 %v923, 7
        %926 = vset.pattern.permute.xlu0 %v924
        %927 = vperm.xlu0 %926, %v922
        %v928 = vpop.permute.xlu0 %927
        %v929 = vlaneseq
        %v930 = vshrl.u32 %v929, 7
        %v931 = vadd.s32 %v930, 8
        %932 = vset.pattern.permute.xlu0 %v931
        %933 = vperm.xlu0 %932, %v922
        %v934 = vpop.permute.xlu0 %933
        %v935 = vlaneseq
        %v936 = vshrl.u32 %v935, 7
        %v937 = vadd.s32 %v936, 16
        %938 = vset.pattern.permute.xlu0 %v937
        %939 = vperm.xlu0 %938, %v922
        %v940 = vpop.permute.xlu0 %939
        %v941 = vlaneseq
        %v942 = vshrl.u32 %v941, 7
        %v943 = vadd.s32 %v942, 24
        %944 = vset.pattern.permute.xlu0 %v943
        %945 = vperm.xlu0 %944, %v922
        %v946 = vpop.permute.xlu0 %945
        %v947 = vlaneseq
        %v948 = vshrl.u32 %v947, 7
        %v949 = vadd.s32 %v948, 32
        %950 = vset.pattern.permute.xlu0 %v949
        %951 = vperm.xlu0 %950, %v922
        %v952 = vpop.permute.xlu0 %951
        %v953 = vlaneseq
        %v954 = vshrl.u32 %v953, 7
        %v955 = vadd.s32 %v954, 40
        %956 = vset.pattern.permute.xlu0 %v955
        %957 = vperm.xlu0 %956, %v922
        %v958 = vpop.permute.xlu0 %957
        %v959 = vlaneseq
        %v960 = vshrl.u32 %v959, 7
        %v961 = vadd.s32 %v960, 48
        %962 = vset.pattern.permute.xlu0 %v961
        %963 = vperm.xlu0 %962, %v922
        %v964 = vpop.permute.xlu0 %963
        %v965 = vlaneseq
        %v966 = vshrl.u32 %v965, 7
        %v967 = vadd.s32 %v966, 56
        %968 = vset.pattern.permute.xlu0 %v967
        %969 = vperm.xlu0 %968, %v922
        %v970 = vpop.permute.xlu0 %969
        %v971 = vlaneseq
        %v972 = vshrl.u32 %v971, 7
        %v973 = vadd.s32 %v972, 64
        %974 = vset.pattern.permute.xlu0 %v973
        %975 = vperm.xlu0 %974, %v922
        %v976 = vpop.permute.xlu0 %975
        %v977 = vlaneseq
        %v978 = vshrl.u32 %v977, 7
        %v979 = vadd.s32 %v978, 72
        %980 = vset.pattern.permute.xlu0 %v979
        %981 = vperm.xlu0 %980, %v922
        %v982 = vpop.permute.xlu0 %981
        %v983 = vlaneseq
        %v984 = vshrl.u32 %v983, 7
        %v985 = vadd.s32 %v984, 80
        %986 = vset.pattern.permute.xlu0 %v985
        %987 = vperm.xlu0 %986, %v922
        %v988 = vpop.permute.xlu0 %987
        %v989 = vlaneseq
        %v990 = vshrl.u32 %v989, 7
        %v991 = vadd.s32 %v990, 88
        %992 = vset.pattern.permute.xlu0 %v991
        %993 = vperm.xlu0 %992, %v922
        %v994 = vpop.permute.xlu0 %993
        %v995 = vlaneseq
        %v996 = vshrl.u32 %v995, 7
        %v997 = vadd.s32 %v996, 96
        %998 = vset.pattern.permute.xlu0 %v997
        %999 = vperm.xlu0 %998, %v922
        %v1000 = vpop.permute.xlu0 %999
        %v1001 = vlaneseq
        %v1002 = vshrl.u32 %v1001, 7
        %v1003 = vadd.s32 %v1002, 104
        %1004 = vset.pattern.permute.xlu0 %v1003
        %1005 = vperm.xlu0 %1004, %v922
        %v1006 = vpop.permute.xlu0 %1005
        %v1007 = vlaneseq
        %v1008 = vshrl.u32 %v1007, 7
        %v1009 = vadd.s32 %v1008, 112
        %1010 = vset.pattern.permute.xlu0 %v1009
        %1011 = vperm.xlu0 %1010, %v922
        %v1012 = vpop.permute.xlu0 %1011
        %v1013 = vlaneseq
        %v1014 = vshrl.u32 %v1013, 7
        %v1015 = vadd.s32 %v1014, 120
        %1016 = vset.pattern.permute.xlu0 %v1015
        %1017 = vperm.xlu0 %1016, %v922
        %v1018 = vpop.permute.xlu0 %1017
        %v1019 = vperm.slane %v532, 5
        %v1020 = vlaneseq
        %v1021 = vshrl.u32 %v1020, 7
        %1023 = vset.pattern.permute.xlu0 %v1021
        %1024 = vperm.xlu0 %1023, %v1019
        %v1025 = vpop.permute.xlu0 %1024
        %v1026 = vlaneseq
        %v1027 = vshrl.u32 %v1026, 7
        %v1028 = vadd.s32 %v1027, 8
        %1029 = vset.pattern.permute.xlu0 %v1028
        %1030 = vperm.xlu0 %1029, %v1019
        %v1031 = vpop.permute.xlu0 %1030
        %v1032 = vlaneseq
        %v1033 = vshrl.u32 %v1032, 7
        %v1034 = vadd.s32 %v1033, 16
        %1035 = vset.pattern.permute.xlu0 %v1034
        %1036 = vperm.xlu0 %1035, %v1019
        %v1037 = vpop.permute.xlu0 %1036
        %v1038 = vlaneseq
        %v1039 = vshrl.u32 %v1038, 7
        %v1040 = vadd.s32 %v1039, 24
        %1041 = vset.pattern.permute.xlu0 %v1040
        %1042 = vperm.xlu0 %1041, %v1019
        %v1043 = vpop.permute.xlu0 %1042
        %v1044 = vlaneseq
        %v1045 = vshrl.u32 %v1044, 7
        %v1046 = vadd.s32 %v1045, 32
        %1047 = vset.pattern.permute.xlu0 %v1046
        %1048 = vperm.xlu0 %1047, %v1019
        %v1049 = vpop.permute.xlu0 %1048
        %v1050 = vlaneseq
        %v1051 = vshrl.u32 %v1050, 7
        %v1052 = vadd.s32 %v1051, 40
        %1053 = vset.pattern.permute.xlu0 %v1052
        %1054 = vperm.xlu0 %1053, %v1019
        %v1055 = vpop.permute.xlu0 %1054
        %v1056 = vlaneseq
        %v1057 = vshrl.u32 %v1056, 7
        %v1058 = vadd.s32 %v1057, 48
        %1059 = vset.pattern.permute.xlu0 %v1058
        %1060 = vperm.xlu0 %1059, %v1019
        %v1061 = vpop.permute.xlu0 %1060
        %v1062 = vlaneseq
        %v1063 = vshrl.u32 %v1062, 7
        %v1064 = vadd.s32 %v1063, 56
        %1065 = vset.pattern.permute.xlu0 %v1064
        %1066 = vperm.xlu0 %1065, %v1019
        %v1067 = vpop.permute.xlu0 %1066
        %v1068 = vlaneseq
        %v1069 = vshrl.u32 %v1068, 7
        %v1070 = vadd.s32 %v1069, 64
        %1071 = vset.pattern.permute.xlu0 %v1070
        %1072 = vperm.xlu0 %1071, %v1019
        %v1073 = vpop.permute.xlu0 %1072
        %v1074 = vlaneseq
        %v1075 = vshrl.u32 %v1074, 7
        %v1076 = vadd.s32 %v1075, 72
        %1077 = vset.pattern.permute.xlu0 %v1076
        %1078 = vperm.xlu0 %1077, %v1019
        %v1079 = vpop.permute.xlu0 %1078
        %v1080 = vlaneseq
        %v1081 = vshrl.u32 %v1080, 7
        %v1082 = vadd.s32 %v1081, 80
        %1083 = vset.pattern.permute.xlu0 %v1082
        %1084 = vperm.xlu0 %1083, %v1019
        %v1085 = vpop.permute.xlu0 %1084
        %v1086 = vlaneseq
        %v1087 = vshrl.u32 %v1086, 7
        %v1088 = vadd.s32 %v1087, 88
        %1089 = vset.pattern.permute.xlu0 %v1088
        %1090 = vperm.xlu0 %1089, %v1019
        %v1091 = vpop.permute.xlu0 %1090
        %v1092 = vlaneseq
        %v1093 = vshrl.u32 %v1092, 7
        %v1094 = vadd.s32 %v1093, 96
        %1095 = vset.pattern.permute.xlu0 %v1094
        %1096 = vperm.xlu0 %1095, %v1019
        %v1097 = vpop.permute.xlu0 %1096
        %v1098 = vlaneseq
        %v1099 = vshrl.u32 %v1098, 7
        %v1100 = vadd.s32 %v1099, 104
        %1101 = vset.pattern.permute.xlu0 %v1100
        %1102 = vperm.xlu0 %1101, %v1019
        %v1103 = vpop.permute.xlu0 %1102
        %v1104 = vlaneseq
        %v1105 = vshrl.u32 %v1104, 7
        %v1106 = vadd.s32 %v1105, 112
        %1107 = vset.pattern.permute.xlu0 %v1106
        %1108 = vperm.xlu0 %1107, %v1019
        %v1109 = vpop.permute.xlu0 %1108
        %v1110 = vlaneseq
        %v1111 = vshrl.u32 %v1110, 7
        %v1112 = vadd.s32 %v1111, 120
        %1113 = vset.pattern.permute.xlu0 %v1112
        %1114 = vperm.xlu0 %1113, %v1019
        %v1115 = vpop.permute.xlu0 %1114
        %v1116 = vperm.slane %v532, 6
        %v1117 = vlaneseq
        %v1118 = vshrl.u32 %v1117, 7
        %1120 = vset.pattern.permute.xlu0 %v1118
        %1121 = vperm.xlu0 %1120, %v1116
        %v1122 = vpop.permute.xlu0 %1121
        %v1123 = vlaneseq
        %v1124 = vshrl.u32 %v1123, 7
        %v1125 = vadd.s32 %v1124, 8
        %1126 = vset.pattern.permute.xlu0 %v1125
        %1127 = vperm.xlu0 %1126, %v1116
        %v1128 = vpop.permute.xlu0 %1127
        %v1129 = vlaneseq
        %v1130 = vshrl.u32 %v1129, 7
        %v1131 = vadd.s32 %v1130, 16
        %1132 = vset.pattern.permute.xlu0 %v1131
        %1133 = vperm.xlu0 %1132, %v1116
        %v1134 = vpop.permute.xlu0 %1133
        %v1135 = vlaneseq
        %v1136 = vshrl.u32 %v1135, 7
        %v1137 = vadd.s32 %v1136, 24
        %1138 = vset.pattern.permute.xlu0 %v1137
        %1139 = vperm.xlu0 %1138, %v1116
        %v1140 = vpop.permute.xlu0 %1139
        %v1141 = vlaneseq
        %v1142 = vshrl.u32 %v1141, 7
        %v1143 = vadd.s32 %v1142, 32
        %1144 = vset.pattern.permute.xlu0 %v1143
        %1145 = vperm.xlu0 %1144, %v1116
        %v1146 = vpop.permute.xlu0 %1145
        %v1147 = vlaneseq
        %v1148 = vshrl.u32 %v1147, 7
        %v1149 = vadd.s32 %v1148, 40
        %1150 = vset.pattern.permute.xlu0 %v1149
        %1151 = vperm.xlu0 %1150, %v1116
        %v1152 = vpop.permute.xlu0 %1151
        %v1153 = vlaneseq
        %v1154 = vshrl.u32 %v1153, 7
        %v1155 = vadd.s32 %v1154, 48
        %1156 = vset.pattern.permute.xlu0 %v1155
        %1157 = vperm.xlu0 %1156, %v1116
        %v1158 = vpop.permute.xlu0 %1157
        %v1159 = vlaneseq
        %v1160 = vshrl.u32 %v1159, 7
        %v1161 = vadd.s32 %v1160, 56
        %1162 = vset.pattern.permute.xlu0 %v1161
        %1163 = vperm.xlu0 %1162, %v1116
        %v1164 = vpop.permute.xlu0 %1163
        %v1165 = vlaneseq
        %v1166 = vshrl.u32 %v1165, 7
        %v1167 = vadd.s32 %v1166, 64
        %1168 = vset.pattern.permute.xlu0 %v1167
        %1169 = vperm.xlu0 %1168, %v1116
        %v1170 = vpop.permute.xlu0 %1169
        %v1171 = vlaneseq
        %v1172 = vshrl.u32 %v1171, 7
        %v1173 = vadd.s32 %v1172, 72
        %1174 = vset.pattern.permute.xlu0 %v1173
        %1175 = vperm.xlu0 %1174, %v1116
        %v1176 = vpop.permute.xlu0 %1175
        %v1177 = vlaneseq
        %v1178 = vshrl.u32 %v1177, 7
        %v1179 = vadd.s32 %v1178, 80
        %1180 = vset.pattern.permute.xlu0 %v1179
        %1181 = vperm.xlu0 %1180, %v1116
        %v1182 = vpop.permute.xlu0 %1181
        %v1183 = vlaneseq
        %v1184 = vshrl.u32 %v1183, 7
        %v1185 = vadd.s32 %v1184, 88
        %1186 = vset.pattern.permute.xlu0 %v1185
        %1187 = vperm.xlu0 %1186, %v1116
        %v1188 = vpop.permute.xlu0 %1187
        %v1189 = vlaneseq
        %v1190 = vshrl.u32 %v1189, 7
        %v1191 = vadd.s32 %v1190, 96
        %1192 = vset.pattern.permute.xlu0 %v1191
        %1193 = vperm.xlu0 %1192, %v1116
        %v1194 = vpop.permute.xlu0 %1193
        %v1195 = vlaneseq
        %v1196 = vshrl.u32 %v1195, 7
        %v1197 = vadd.s32 %v1196, 104
        %1198 = vset.pattern.permute.xlu0 %v1197
        %1199 = vperm.xlu0 %1198, %v1116
        %v1200 = vpop.permute.xlu0 %1199
        %v1201 = vlaneseq
        %v1202 = vshrl.u32 %v1201, 7
        %v1203 = vadd.s32 %v1202, 112
        %1204 = vset.pattern.permute.xlu0 %v1203
        %1205 = vperm.xlu0 %1204, %v1116
        %v1206 = vpop.permute.xlu0 %1205
        %v1207 = vlaneseq
        %v1208 = vshrl.u32 %v1207, 7
        %v1209 = vadd.s32 %v1208, 120
        %1210 = vset.pattern.permute.xlu0 %v1209
        %1211 = vperm.xlu0 %1210, %v1116
        %v1212 = vpop.permute.xlu0 %1211
        %v1213 = vperm.slane %v532, 7
        %v1214 = vlaneseq
        %v1215 = vshrl.u32 %v1214, 7
        %1217 = vset.pattern.permute.xlu0 %v1215
        %1218 = vperm.xlu0 %1217, %v1213
        %v1219 = vpop.permute.xlu0 %1218
        %v1220 = vlaneseq
        %v1221 = vshrl.u32 %v1220, 7
        %v1222 = vadd.s32 %v1221, 8
        %1223 = vset.pattern.permute.xlu0 %v1222
        %1224 = vperm.xlu0 %1223, %v1213
        %v1225 = vpop.permute.xlu0 %1224
        %v1226 = vlaneseq
        %v1227 = vshrl.u32 %v1226, 7
        %v1228 = vadd.s32 %v1227, 16
        %1229 = vset.pattern.permute.xlu0 %v1228
        %1230 = vperm.xlu0 %1229, %v1213
        %v1231 = vpop.permute.xlu0 %1230
        %v1232 = vlaneseq
        %v1233 = vshrl.u32 %v1232, 7
        %v1234 = vadd.s32 %v1233, 24
        %1235 = vset.pattern.permute.xlu0 %v1234
        %1236 = vperm.xlu0 %1235, %v1213
        %v1237 = vpop.permute.xlu0 %1236
        %v1238 = vlaneseq
        %v1239 = vshrl.u32 %v1238, 7
        %v1240 = vadd.s32 %v1239, 32
        %1241 = vset.pattern.permute.xlu0 %v1240
        %1242 = vperm.xlu0 %1241, %v1213
        %v1243 = vpop.permute.xlu0 %1242
        %v1244 = vlaneseq
        %v1245 = vshrl.u32 %v1244, 7
        %v1246 = vadd.s32 %v1245, 40
        %1247 = vset.pattern.permute.xlu0 %v1246
        %1248 = vperm.xlu0 %1247, %v1213
        %v1249 = vpop.permute.xlu0 %1248
        %v1250 = vlaneseq
        %v1251 = vshrl.u32 %v1250, 7
        %v1252 = vadd.s32 %v1251, 48
        %1253 = vset.pattern.permute.xlu0 %v1252
        %1254 = vperm.xlu0 %1253, %v1213
        %v1255 = vpop.permute.xlu0 %1254
        %v1256 = vlaneseq
        %v1257 = vshrl.u32 %v1256, 7
        %v1258 = vadd.s32 %v1257, 56
        %1259 = vset.pattern.permute.xlu0 %v1258
        %1260 = vperm.xlu0 %1259, %v1213
        %v1261 = vpop.permute.xlu0 %1260
        %v1262 = vlaneseq
        %v1263 = vshrl.u32 %v1262, 7
        %v1264 = vadd.s32 %v1263, 64
        %1265 = vset.pattern.permute.xlu0 %v1264
        %1266 = vperm.xlu0 %1265, %v1213
        %v1267 = vpop.permute.xlu0 %1266
        %v1268 = vlaneseq
        %v1269 = vshrl.u32 %v1268, 7
        %v1270 = vadd.s32 %v1269, 72
        %1271 = vset.pattern.permute.xlu0 %v1270
        %1272 = vperm.xlu0 %1271, %v1213
        %v1273 = vpop.permute.xlu0 %1272
        %v1274 = vlaneseq
        %v1275 = vshrl.u32 %v1274, 7
        %v1276 = vadd.s32 %v1275, 80
        %1277 = vset.pattern.permute.xlu0 %v1276
        %1278 = vperm.xlu0 %1277, %v1213
        %v1279 = vpop.permute.xlu0 %1278
        %v1280 = vlaneseq
        %v1281 = vshrl.u32 %v1280, 7
        %v1282 = vadd.s32 %v1281, 88
        %1283 = vset.pattern.permute.xlu0 %v1282
        %1284 = vperm.xlu0 %1283, %v1213
        %v1285 = vpop.permute.xlu0 %1284
        %v1286 = vlaneseq
        %v1287 = vshrl.u32 %v1286, 7
        %v1288 = vadd.s32 %v1287, 96
        %1289 = vset.pattern.permute.xlu0 %v1288
        %1290 = vperm.xlu0 %1289, %v1213
        %v1291 = vpop.permute.xlu0 %1290
        %v1292 = vlaneseq
        %v1293 = vshrl.u32 %v1292, 7
        %v1294 = vadd.s32 %v1293, 104
        %1295 = vset.pattern.permute.xlu0 %v1294
        %1296 = vperm.xlu0 %1295, %v1213
        %v1297 = vpop.permute.xlu0 %1296
        %v1298 = vlaneseq
        %v1299 = vshrl.u32 %v1298, 7
        %v1300 = vadd.s32 %v1299, 112
        %1301 = vset.pattern.permute.xlu0 %v1300
        %1302 = vperm.xlu0 %1301, %v1213
        %v1303 = vpop.permute.xlu0 %1302
        %v1304 = vlaneseq
        %v1305 = vshrl.u32 %v1304, 7
        %v1306 = vadd.s32 %v1305, 120
        %1307 = vset.pattern.permute.xlu0 %v1306
        %1308 = vperm.xlu0 %1307, %v1213
        %v1309 = vpop.permute.xlu0 %1308
        %v1310 = vmul.f32 %v404, %v540
        %v1311 = vmul.f32 %v405, %v546
        %v1312 = vmul.f32 %v406, %v552
        %v1313 = vmul.f32 %v407, %v558
        %v1314 = vmul.f32 %v408, %v564
        %v1315 = vmul.f32 %v409, %v570
        %v1316 = vmul.f32 %v410, %v576
        %v1317 = vmul.f32 %v411, %v582
        %v1318 = vmul.f32 %v412, %v588
        %v1319 = vmul.f32 %v413, %v594
        %v1320 = vmul.f32 %v414, %v600
        %v1321 = vmul.f32 %v415, %v606
        %v1322 = vmul.f32 %v416, %v612
        %v1323 = vmul.f32 %v417, %v618
        %v1324 = vmul.f32 %v418, %v624
        %v1325 = vmul.f32 %v419, %v630
        %v1326 = vmul.f32 %v420, %v637
        %v1327 = vmul.f32 %v421, %v643
        %v1328 = vmul.f32 %v422, %v649
        %v1329 = vmul.f32 %v423, %v655
        %v1330 = vmul.f32 %v424, %v661
        %v1331 = vmul.f32 %v425, %v667
        %v1332 = vmul.f32 %v426, %v673
        %v1333 = vmul.f32 %v427, %v679
        %v1334 = vmul.f32 %v428, %v685
        %v1335 = vmul.f32 %v429, %v691
        %v1336 = vmul.f32 %v430, %v697
        %v1337 = vmul.f32 %v431, %v703
        %v1338 = vmul.f32 %v432, %v709
        %v1339 = vmul.f32 %v433, %v715
        %v1340 = vmul.f32 %v434, %v721
        %v1341 = vmul.f32 %v435, %v727
        %v1342 = vmul.f32 %v436, %v734
        %v1343 = vmul.f32 %v437, %v740
        %v1344 = vmul.f32 %v438, %v746
        %v1345 = vmul.f32 %v439, %v752
        %v1346 = vmul.f32 %v440, %v758
        %v1347 = vmul.f32 %v441, %v764
        %v1348 = vmul.f32 %v442, %v770
        %v1349 = vmul.f32 %v443, %v776
        %v1350 = vmul.f32 %v444, %v782
        %v1351 = vmul.f32 %v445, %v788
        %v1352 = vmul.f32 %v446, %v794
        %v1353 = vmul.f32 %v447, %v800
        %v1354 = vmul.f32 %v448, %v806
        %v1355 = vmul.f32 %v449, %v812
        %v1356 = vmul.f32 %v450, %v818
        %v1357 = vmul.f32 %v451, %v824
        %v1358 = vmul.f32 %v452, %v831
        %v1359 = vmul.f32 %v453, %v837
        %v1360 = vmul.f32 %v454, %v843
        %v1361 = vmul.f32 %v455, %v849
        %v1362 = vmul.f32 %v456, %v855
        %v1363 = vmul.f32 %v457, %v861
        %v1364 = vmul.f32 %v458, %v867
        %v1365 = vmul.f32 %v459, %v873
        %v1366 = vmul.f32 %v460, %v879
        %v1367 = vmul.f32 %v461, %v885
        %v1368 = vmul.f32 %v462, %v891
        %v1369 = vmul.f32 %v463, %v897
        %v1370 = vmul.f32 %v464, %v903
        %v1371 = vmul.f32 %v465, %v909
        %v1372 = vmul.f32 %v466, %v915
        %v1373 = vmul.f32 %v467, %v921
        %v1374 = vmul.f32 %v468, %v928
        %v1375 = vmul.f32 %v469, %v934
        %v1376 = vmul.f32 %v470, %v940
        %v1377 = vmul.f32 %v471, %v946
        %v1378 = vmul.f32 %v472, %v952
        %v1379 = vmul.f32 %v473, %v958
        %v1380 = vmul.f32 %v474, %v964
        %v1381 = vmul.f32 %v475, %v970
        %v1382 = vmul.f32 %v476, %v976
        %v1383 = vmul.f32 %v477, %v982
        %v1384 = vmul.f32 %v478, %v988
        %v1385 = vmul.f32 %v479, %v994
        %v1386 = vmul.f32 %v480, %v1000
        %v1387 = vmul.f32 %v481, %v1006
        %v1388 = vmul.f32 %v482, %v1012
        %v1389 = vmul.f32 %v483, %v1018
        %v1390 = vmul.f32 %v484, %v1025
        %v1391 = vmul.f32 %v485, %v1031
        %v1392 = vmul.f32 %v486, %v1037
        %v1393 = vmul.f32 %v487, %v1043
        %v1394 = vmul.f32 %v488, %v1049
        %v1395 = vmul.f32 %v489, %v1055
        %v1396 = vmul.f32 %v490, %v1061
        %v1397 = vmul.f32 %v491, %v1067
        %v1398 = vmul.f32 %v492, %v1073
        %v1399 = vmul.f32 %v493, %v1079
        %v1400 = vmul.f32 %v494, %v1085
        %v1401 = vmul.f32 %v495, %v1091
        %v1402 = vmul.f32 %v496, %v1097
        %v1403 = vmul.f32 %v497, %v1103
        %v1404 = vmul.f32 %v498, %v1109
        %v1405 = vmul.f32 %v499, %v1115
        %v1406 = vmul.f32 %v500, %v1122
        %v1407 = vmul.f32 %v501, %v1128
        %v1408 = vmul.f32 %v502, %v1134
        %v1409 = vmul.f32 %v503, %v1140
        %v1410 = vmul.f32 %v504, %v1146
        %v1411 = vmul.f32 %v505, %v1152
        %v1412 = vmul.f32 %v506, %v1158
        %v1413 = vmul.f32 %v507, %v1164
        %v1414 = vmul.f32 %v508, %v1170
        %v1415 = vmul.f32 %v509, %v1176
        %v1416 = vmul.f32 %v510, %v1182
        %v1417 = vmul.f32 %v511, %v1188
        %v1418 = vmul.f32 %v512, %v1194
        %v1419 = vmul.f32 %v513, %v1200
        %v1420 = vmul.f32 %v514, %v1206
        %v1421 = vmul.f32 %v515, %v1212
        %v1422 = vmul.f32 %v516, %v1219
        %v1423 = vmul.f32 %v517, %v1225
        %v1424 = vmul.f32 %v518, %v1231
        %v1425 = vmul.f32 %v519, %v1237
        %v1426 = vmul.f32 %v520, %v1243
        %v1427 = vmul.f32 %v521, %v1249
        %v1428 = vmul.f32 %v522, %v1255
        %v1429 = vmul.f32 %v523, %v1261
        %v1430 = vmul.f32 %v524, %v1267
        %v1431 = vmul.f32 %v525, %v1273
        %v1432 = vmul.f32 %v526, %v1279
        %v1433 = vmul.f32 %v527, %v1285
        %v1434 = vmul.f32 %v528, %v1291
        %v1435 = vmul.f32 %v529, %v1297
        %v1436 = vmul.f32 %v530, %v1303
        %v1437 = vmul.f32 %v531, %v1309
        %v1438 = vadd.f32 %v1310, %v1311
        %v1439 = vadd.f32 %v1438, %v1312
        %v1440 = vadd.f32 %v1439, %v1313
        %v1441 = vadd.f32 %v1440, %v1314
        %v1442 = vadd.f32 %v1441, %v1315
        %v1443 = vadd.f32 %v1442, %v1316
        %v1444 = vadd.f32 %v1443, %v1317
        %v1445 = vadd.f32 %v1444, %v1318
        %v1446 = vadd.f32 %v1445, %v1319
        %v1447 = vadd.f32 %v1446, %v1320
        %v1448 = vadd.f32 %v1447, %v1321
        %v1449 = vadd.f32 %v1448, %v1322
        %v1450 = vadd.f32 %v1449, %v1323
        %v1451 = vadd.f32 %v1450, %v1324
        %v1452 = vadd.f32 %v1451, %v1325
        %v1453 = vrot.slane %v1452, 4
        %v1454 = vadd.f32 %v1452, %v1453
        %v1455 = vrot.slane %v1454, 2
        %v1456 = vadd.f32 %v1454, %v1455
        %v1457 = vrot.slane %v1456, 1
        %v1458 = vadd.f32 %v1456, %v1457
        %v1459 = vadd.f32 %v1326, %v1327
        %v1460 = vadd.f32 %v1459, %v1328
        %v1461 = vadd.f32 %v1460, %v1329
        %v1462 = vadd.f32 %v1461, %v1330
        %v1463 = vadd.f32 %v1462, %v1331
        %v1464 = vadd.f32 %v1463, %v1332
        %v1465 = vadd.f32 %v1464, %v1333
        %v1466 = vadd.f32 %v1465, %v1334
        %v1467 = vadd.f32 %v1466, %v1335
        %v1468 = vadd.f32 %v1467, %v1336
        %v1469 = vadd.f32 %v1468, %v1337
        %v1470 = vadd.f32 %v1469, %v1338
        %v1471 = vadd.f32 %v1470, %v1339
        %v1472 = vadd.f32 %v1471, %v1340
        %v1473 = vadd.f32 %v1472, %v1341
        %v1474 = vrot.slane %v1473, 4
        %v1475 = vadd.f32 %v1473, %v1474
        %v1476 = vrot.slane %v1475, 2
        %v1477 = vadd.f32 %v1475, %v1476
        %v1478 = vrot.slane %v1477, 1
        %v1479 = vadd.f32 %v1477, %v1478
        %v1480 = vadd.f32 %v1342, %v1343
        %v1481 = vadd.f32 %v1480, %v1344
        %v1482 = vadd.f32 %v1481, %v1345
        %v1483 = vadd.f32 %v1482, %v1346
        %v1484 = vadd.f32 %v1483, %v1347
        %v1485 = vadd.f32 %v1484, %v1348
        %v1486 = vadd.f32 %v1485, %v1349
        %v1487 = vadd.f32 %v1486, %v1350
        %v1488 = vadd.f32 %v1487, %v1351
        %v1489 = vadd.f32 %v1488, %v1352
        %v1490 = vadd.f32 %v1489, %v1353
        %v1491 = vadd.f32 %v1490, %v1354
        %v1492 = vadd.f32 %v1491, %v1355
        %v1493 = vadd.f32 %v1492, %v1356
        %v1494 = vadd.f32 %v1493, %v1357
        %v1495 = vrot.slane %v1494, 4
        %v1496 = vadd.f32 %v1494, %v1495
        %v1497 = vrot.slane %v1496, 2
        %v1498 = vadd.f32 %v1496, %v1497
        %v1499 = vrot.slane %v1498, 1
        %v1500 = vadd.f32 %v1498, %v1499
        %v1501 = vadd.f32 %v1358, %v1359
        %v1502 = vadd.f32 %v1501, %v1360
        %v1503 = vadd.f32 %v1502, %v1361
        %v1504 = vadd.f32 %v1503, %v1362
        %v1505 = vadd.f32 %v1504, %v1363
        %v1506 = vadd.f32 %v1505, %v1364
        %v1507 = vadd.f32 %v1506, %v1365
        %v1508 = vadd.f32 %v1507, %v1366
        %v1509 = vadd.f32 %v1508, %v1367
        %v1510 = vadd.f32 %v1509, %v1368
        %v1511 = vadd.f32 %v1510, %v1369
        %v1512 = vadd.f32 %v1511, %v1370
        %v1513 = vadd.f32 %v1512, %v1371
        %v1514 = vadd.f32 %v1513, %v1372
        %v1515 = vadd.f32 %v1514, %v1373
        %v1516 = vrot.slane %v1515, 4
        %v1517 = vadd.f32 %v1515, %v1516
        %v1518 = vrot.slane %v1517, 2
        %v1519 = vadd.f32 %v1517, %v1518
        %v1520 = vrot.slane %v1519, 1
        %v1521 = vadd.f32 %v1519, %v1520
        %v1522 = vadd.f32 %v1374, %v1375
        %v1523 = vadd.f32 %v1522, %v1376
        %v1524 = vadd.f32 %v1523, %v1377
        %v1525 = vadd.f32 %v1524, %v1378
        %v1526 = vadd.f32 %v1525, %v1379
        %v1527 = vadd.f32 %v1526, %v1380
        %v1528 = vadd.f32 %v1527, %v1381
        %v1529 = vadd.f32 %v1528, %v1382
        %v1530 = vadd.f32 %v1529, %v1383
        %v1531 = vadd.f32 %v1530, %v1384
        %v1532 = vadd.f32 %v1531, %v1385
        %v1533 = vadd.f32 %v1532, %v1386
        %v1534 = vadd.f32 %v1533, %v1387
        %v1535 = vadd.f32 %v1534, %v1388
        %v1536 = vadd.f32 %v1535, %v1389
        %v1537 = vrot.slane %v1536, 4
        %v1538 = vadd.f32 %v1536, %v1537
        %v1539 = vrot.slane %v1538, 2
        %v1540 = vadd.f32 %v1538, %v1539
        %v1541 = vrot.slane %v1540, 1
        %v1542 = vadd.f32 %v1540, %v1541
        %v1543 = vadd.f32 %v1390, %v1391
        %v1544 = vadd.f32 %v1543, %v1392
        %v1545 = vadd.f32 %v1544, %v1393
        %v1546 = vadd.f32 %v1545, %v1394
        %v1547 = vadd.f32 %v1546, %v1395
        %v1548 = vadd.f32 %v1547, %v1396
        %v1549 = vadd.f32 %v1548, %v1397
        %v1550 = vadd.f32 %v1549, %v1398
        %v1551 = vadd.f32 %v1550, %v1399
        %v1552 = vadd.f32 %v1551, %v1400
        %v1553 = vadd.f32 %v1552, %v1401
        %v1554 = vadd.f32 %v1553, %v1402
        %v1555 = vadd.f32 %v1554, %v1403
        %v1556 = vadd.f32 %v1555, %v1404
        %v1557 = vadd.f32 %v1556, %v1405
        %v1558 = vrot.slane %v1557, 4
        %v1559 = vadd.f32 %v1557, %v1558
        %v1560 = vrot.slane %v1559, 2
        %v1561 = vadd.f32 %v1559, %v1560
        %v1562 = vrot.slane %v1561, 1
        %v1563 = vadd.f32 %v1561, %v1562
        %v1564 = vadd.f32 %v1406, %v1407
        %v1565 = vadd.f32 %v1564, %v1408
        %v1566 = vadd.f32 %v1565, %v1409
        %v1567 = vadd.f32 %v1566, %v1410
        %v1568 = vadd.f32 %v1567, %v1411
        %v1569 = vadd.f32 %v1568, %v1412
        %v1570 = vadd.f32 %v1569, %v1413
        %v1571 = vadd.f32 %v1570, %v1414
        %v1572 = vadd.f32 %v1571, %v1415
        %v1573 = vadd.f32 %v1572, %v1416
        %v1574 = vadd.f32 %v1573, %v1417
        %v1575 = vadd.f32 %v1574, %v1418
        %v1576 = vadd.f32 %v1575, %v1419
        %v1577 = vadd.f32 %v1576, %v1420
        %v1578 = vadd.f32 %v1577, %v1421
        %v1579 = vrot.slane %v1578, 4
        %v1580 = vadd.f32 %v1578, %v1579
        %v1581 = vrot.slane %v1580, 2
        %v1582 = vadd.f32 %v1580, %v1581
        %v1583 = vrot.slane %v1582, 1
        %v1584 = vadd.f32 %v1582, %v1583
        %v1585 = vadd.f32 %v1422, %v1423
        %v1586 = vadd.f32 %v1585, %v1424
        %v1587 = vadd.f32 %v1586, %v1425
        %v1588 = vadd.f32 %v1587, %v1426
        %v1589 = vadd.f32 %v1588, %v1427
        %v1590 = vadd.f32 %v1589, %v1428
        %v1591 = vadd.f32 %v1590, %v1429
        %v1592 = vadd.f32 %v1591, %v1430
        %v1593 = vadd.f32 %v1592, %v1431
        %v1594 = vadd.f32 %v1593, %v1432
        %v1595 = vadd.f32 %v1594, %v1433
        %v1596 = vadd.f32 %v1595, %v1434
        %v1597 = vadd.f32 %v1596, %v1435
        %v1598 = vadd.f32 %v1597, %v1436
        %v1599 = vadd.f32 %v1598, %v1437
        %v1600 = vrot.slane %v1599, 4
        %v1601 = vadd.f32 %v1599, %v1600
        %v1602 = vrot.slane %v1601, 2
        %v1603 = vadd.f32 %v1601, %v1602
        %v1604 = vrot.slane %v1603, 1
        %v1605 = vadd.f32 %v1603, %v1604
        %vm1614 = vcmask 1041409
        %v1615 = vsel %vm1614, %v1479, %v1458
        %vm1616 = vcmask 1042434
        %v1617 = vsel %vm1616, %v1500, %v1615
        %vm1618 = vcmask 1043459
        %v1619 = vsel %vm1618, %v1521, %v1617
        %vm1620 = vcmask 1044484
        %v1621 = vsel %vm1620, %v1542, %v1619
        %vm1622 = vcmask 1045509
        %v1623 = vsel %vm1622, %v1563, %v1621
        %vm1624 = vcmask 1046534
        %v1625 = vsel %vm1624, %v1584, %v1623
        %vm1626 = vcmask 1047559
        %v1627 = vsel %vm1626, %v1605, %v1625
        %v1629 = vadd.f32 %v533, %v1627
        %1630 = vst [vmem:[#allocation2] sm:$0xff] %v1629
        %v1631 = vld [vmem:[#allocation3] sm:$0xff]
        %1632 = vadd.xlane.f32.xlu0 %v532
        %v1633 = vpop.xlane.xlu0 %1632
        %v1634 = vadd.f32 %v1631, %v1633
        %vm1635 = vcmask 7168
        %1636 = vst.msk [vmem:[#allocation3] sm:$0xff] %vm1635, %v1634
        %p1637 = scmp.eq.s32.totalorder %s37, 1
        // Predicated region
        $region57: #{tpu_custom_call.1} parent=35 // pred_check
          %p1638 = pneg %p1637
        $region58: #{tpu_custom_call.1} parent=35 // pred_check_branch
          %1640 = sbr.rel (%p1638) target = $region60
        $region59: #{tpu_custom_call.1} parent=35 // pred_region
          %v1641 = vld [vmem:[#allocation9] sm:$0xff]
          %v1642 = vld [vmem:[#allocation9 + $0x8] sm:$0xff]
          %v1643 = vld [vmem:[#allocation9 + $0x10] sm:$0xff]
          %v1644 = vld [vmem:[#allocation9 + $0x18] sm:$0xff]
          %v1645 = vld [vmem:[#allocation9 + $0x20] sm:$0xff]
          %v1646 = vld [vmem:[#allocation9 + $0x28] sm:$0xff]
          %v1647 = vld [vmem:[#allocation9 + $0x30] sm:$0xff]
          %v1648 = vld [vmem:[#allocation9 + $0x38] sm:$0xff]
          %v1649 = vld [vmem:[#allocation9 + $0x40] sm:$0xff]
          %v1650 = vld [vmem:[#allocation9 + $0x48] sm:$0xff]
          %v1651 = vld [vmem:[#allocation9 + $0x50] sm:$0xff]
          %v1652 = vld [vmem:[#allocation9 + $0x58] sm:$0xff]
          %v1653 = vld [vmem:[#allocation9 + $0x60] sm:$0xff]
          %v1654 = vld [vmem:[#allocation9 + $0x68] sm:$0xff]
          %v1655 = vld [vmem:[#allocation9 + $0x70] sm:$0xff]
          %v1656 = vld [vmem:[#allocation9 + $0x78] sm:$0xff]
          %v1657 = vld [vmem:[#allocation2] sm:$0xff]
          %1658 = vmatpush.msra.mxu0 %v1656
          %1659 = vmatpush.msra.mxu0 %v1655
          %1660 = vmatpush.msra.mxu0 %v1654
          %1661 = vmatpush.msra.mxu0 %v1653
          %1662 = vmatpush.msra.mxu0 %v1652
          %1663 = vmatpush.msra.mxu0 %v1651
          %1664 = vmatpush.msra.mxu0 %v1650
          %1665 = vmatpush.msra.mxu0 %v1649
          %1666 = vmatpush.msra.mxu0 %v1648
          %1667 = vmatpush.msra.mxu0 %v1647
          %1668 = vmatpush.msra.mxu0 %v1646
          %1669 = vmatpush.msra.mxu0 %v1645
          %1670 = vmatpush.msra.mxu0 %v1644
          %1671 = vmatpush.msra.mxu0 %v1643
          %1672 = vmatpush.msra.mxu0 %v1642
          %1673 = vmatpush.msra.mxu0 %v1641
          %1674 = vmatmul.f32.gmra.mxu0 %v1657
          %v1675 = vpop.f32.mrf.mxu0
          %v1676 = vadd.f32 0.0, %v1675
          %1677 = vdwg.mxu0
          %v1678 = vld [vmem:[#allocation3] sm:$0xff]
          %1680 = vset.pattern.permute.xlu0 0
          %1681 = vperm.xlu0 %1680, %v1678
          %v1682 = vpop.permute.xlu0 %1681
          %v1684 = vrcp.pop %v1682
          %v1685 = vmul.f32 %v1682, %v1684
          %v1686 = vsub.f32 1.0, %v1685
          %v1687 = vmul.f32 %v1684, %v1686
          %v1688 = vadd.f32 %v1684, %v1687
          %vm1689 = vweird.f32 %v1682
          %vm1690 = vweird.f32 %v1684
          %vm1691 = vmor %vm1689, %vm1690
          %v1692 = vsel %vm1691, %v1684, %v1688
          %v1693 = vand.u32 2147483647, %v1682
          %vm1694 = vcmp.eq.f32.partialorder %v1693, 8.507059e+37
          %v1695 = vand.u32 %v1682, 2147483648
          %v1696 = vor.u32 1.1754944e-38, %v1695
          %v1697 = vsel %vm1694, %v1696, %v1692
          %v1698 = vmul.f32 %v1676, %v1697
          %1699 = vst [vmem:[%s388] sm:$0xff] %v1698
          %v1700 = vld [vmem:[%s353] sm:$0xff]
          %v1701 = vand.u32 2147483647, %v1698
          %v1702 = vsub.f32 0.0, %v1701
          %v1703 = vmul.f32 %v1702, 1.442695
          %v1704 = vpow.pop %v1703
          %v1705 = vmax.f32 %v1698, 0.0
          %v1706 = vmul.f32 %v1698, %v1700
          %v1707 = vsub.f32 %v1705, %v1706
          %v1708 = vadd.f32 %v1704, 1.0
          %v1709 = vlog2.pop %v1708
          %v1710 = vmul.f32 %v1709, 0.6931472
          %v1711 = vadd.f32 %v1707, %v1710
          %v1712 = vrot.slane %v1711, 4
          %v1713 = vadd.f32 %v1711, %v1712
          %v1714 = vrot.slane %v1713, 2
          %v1715 = vadd.f32 %v1713, %v1714
          %v1716 = vrot.slane %v1715, 1
          %v1717 = vadd.f32 %v1715, %v1716
          %1718 = vst [vmem:[%s394] sm:$0x1] %v1717
        $region60: #{tpu_custom_call.1} parent=35 // pred_fallthru
          _
        %s1719 = sand.u32 %s155, 1
        %s1720 = scalar_lea.sflag [#allocation6], %s1719
        %s1721 = sand.u32 %s155, 1
        %s1722 = smul.addr %s1721, 8
        %s1723 = scalar_lea.vmem [#allocation12], %s1722
        %s1724 = sand.u32 %s181, 1
        %s1725 = scalar_lea.sflag [#allocation14], %s1724
        %s1726 = sand.u32 %s181, 1
        %s1727 = scalar_lea.vmem [#allocation13], %s1726
        // Predicated region
        $region61: #{tpu_custom_call.1} parent=35 // pred_check
          %p1728 = pneg %p165
        $region62: #{tpu_custom_call.1} parent=35 // pred_check_branch
          %1730 = sbr.rel (%p1728) target = $region64
        $region63: #{tpu_custom_call.1} parent=35 // pred_region
          %1732 = vsyncadd %s1720, 0
          %s1733 = smul.addr %s36, 8
          %s1734 = scalar_lea.hbm %s4, %s1733
          %s1736 = sshll.u32 %s1723, 4
          %s1737 = int_to_ptr.vmem [resolvable:$true] %s1736
          %s1738 = sshll.u32 %s1734, 4
          %s1739 = int_to_ptr.hbm [resolvable:$true] %s1738
          %1741 = dma.vmem_to_hbm [thread:$0]  %s1737, 128, %s1739, %s1720
        $region64: #{tpu_custom_call.1} parent=35 // pred_fallthru
          _
        // Predicated region
        $region65: #{tpu_custom_call.1} parent=35 // pred_check
          %p1742 = pneg %p191
        $region66: #{tpu_custom_call.1} parent=35 // pred_check_branch
          %1744 = sbr.rel (%p1742) target = $region68
        $region67: #{tpu_custom_call.1} parent=35 // pred_region
          %1746 = vsyncadd %s1725, 0
          %s1747 = scalar_lea.hbm %s5, %s36
          %s1749 = sshll.u32 %s1727, 4
          %s1750 = int_to_ptr.vmem [resolvable:$true] %s1749
          %s1751 = sshll.u32 %s1747, 4
          %s1752 = int_to_ptr.hbm [resolvable:$true] %s1751
          %1754 = dma.vmem_to_hbm [thread:$0]  %s1750, 16, %s1752, %s1725
        $region68: #{tpu_custom_call.1} parent=35 // pred_fallthru
          _
      $region36: #{tpu_custom_call.1} parent=5 // pred_fallthru
        _
      %p1755 = scmp.le.s32.totalorder 2, %s27
      // Predicated region
      $region69: #{tpu_custom_call.1} parent=5 // pred_check
        %p1756 = pneg %p1755
      $region70: #{tpu_custom_call.1} parent=5 // pred_check_branch
        %1758 = sbr.rel (%p1756) target = $region72
      $region71: #{tpu_custom_call.1} parent=5 // pred_region
        %s1759 = ssub.s32 %s27, 2
        // Predicated region
        $region73: #{tpu_custom_call.1} parent=71 // pred_check
          %p1760 = pneg %p171
        $region74: #{tpu_custom_call.1} parent=71 // pred_check_branch
          %1762 = sbr.rel (%p1760) target = $region76
        $region75: #{tpu_custom_call.1} parent=71 // pred_region
          %s1763 = sand.u32 %s156, 1
          %s1764 = scalar_lea.sflag [#allocation6], %s1763
          %s1765 = sand.u32 %s156, 1
          %s1766 = smul.addr %s1765, 8
          %s1767 = scalar_lea.vmem [#allocation12], %s1766
          %1769 = dma.done %s1764, 128
        $region76: #{tpu_custom_call.1} parent=71 // pred_fallthru
          _
        // Predicated region
        $region77: #{tpu_custom_call.1} parent=71 // pred_check
          %p1770 = pneg %p197
        $region78: #{tpu_custom_call.1} parent=71 // pred_check_branch
          %1772 = sbr.rel (%p1770) target = $region80
        $region79: #{tpu_custom_call.1} parent=71 // pred_region
          %s1773 = sand.u32 %s182, 1
          %s1774 = scalar_lea.sflag [#allocation14], %s1773
          %s1775 = sand.u32 %s182, 1
          %s1776 = scalar_lea.vmem [#allocation13], %s1775
          %1778 = dma.done %s1774, 16
        $region80: #{tpu_custom_call.1} parent=71 // pred_fallthru
          _
      $region72: #{tpu_custom_call.1} parent=5 // pred_fallthru
        _
    $region6: #{tpu_custom_call.1} parent=1 // loop_footer
      %s31 = sadd.s32 1, %s27
    $region7: #{tpu_custom_call.1} parent=1 // loop_footer_branch
      %26 = sbr.rel target = $region3
    $region8: #{tpu_custom_call.1} parent=1 // loop_exit
      _
    %1779 = vsyncpa [#allocation5], 1
    %s1780 = scalar_lea.sflag [#allocation5], 1
    %1781 = vsyncpa %s1780, 1
    %1782 = vsyncpa [#allocation8], 1
    %s1783 = scalar_lea.sflag [#allocation8], 1
    %1784 = vsyncpa %s1783, 1
    %1785 = vsyncpa [#allocation11], 1
    %s1786 = scalar_lea.sflag [#allocation11], 1
    %1787 = vsyncpa %s1786, 1
    %1788 = vsyncpa [#allocation6], 1
    %s1789 = scalar_lea.sflag [#allocation6], 1
    %1790 = vsyncpa %s1789, 1
    %1791 = vsyncpa [#allocation14], 1
    %s1792 = scalar_lea.sflag [#allocation14], 1
    %1793 = vsyncpa %s1792, 1

</llo_original>
